<compile_context>
chip_gen: v7x
topology: tpu7x:2x2x1
jax: 0.10.0
libtpu: 0.0.40
codegen_flags: <defaults>
</compile_context>

<pallas_src>
import functools

import jax
import jax.numpy as jnp
from jax import lax
from jax.experimental import pallas as pl
from jax.experimental.pallas import tpu as pltpu

H = 128    # LSTM hidden size (hard-coded in the PyTorch module)
D1 = 128   # linear1 output features (folded away on the host)

_VMEM = pl.BlockSpec(memory_space=pltpu.MemorySpace.VMEM)


def _sigmoid(x):
    # 1 EUP op (tanh) + cheap VPU ops instead of exp + reciprocal.
    return 0.5 * (jnp.tanh(0.5 * x) + 1.0)


# ------------------------- fused Pallas kernel -------------------------

def _fused_kernel(seq, B,
                  x_ref, wihc_ref, bc_ref, whhc_ref, vh_ref, const_ref,
                  o_ref,
                  xp_ref):
    """BiLSTM recurrence + (folded) linear1/linear2 + sigmoid, fully fused.

    Row layout (both x_ref and vh_ref, built by the wrapper / host):
      per step t, rows [t*2B : t*2B+B]   = forward direction, time t
                  rows [t*2B+B : (t+1)*2B] = backward direction, time seq-1-t
    """
    B2 = 2 * B

    # Hoisted input projection for BOTH directions, biases folded in:
    # (seq*2B, in) @ (in, 8H) -> (seq*2B, 8H), columns [fwd 4H || bwd 4H].
    xp_ref[...] = (jnp.dot(x_ref[...], wihc_ref[...],
                           preferred_element_type=jnp.float32)
                   + bc_ref[...])

    # Forward rows (first B of each per-step block) take gate columns 0:4H,
    # backward rows take columns 4H:8H.
    dir_mask = lax.broadcasted_iota(jnp.int32, (B2, 4 * H), 0) < B

    def gates_to_hc(g, c):
        # PyTorch nn.LSTM gate order: [i, f, g, o]
        i_g = _sigmoid(g[:, 0 * H:1 * H])
        f_g = _sigmoid(g[:, 1 * H:2 * H])
        g_g = jnp.tanh(g[:, 2 * H:3 * H])
        o_g = _sigmoid(g[:, 3 * H:4 * H])
        c_new = f_g * c + i_g * g_g
        h_new = o_g * jnp.tanh(c_new)
        return h_new, c_new

    c = jnp.zeros((B2, H), jnp.float32)
    acc = jnp.zeros((B2, H), jnp.float32)
    h_bf = jnp.zeros((B2, H), jnp.bfloat16)

    # Fully unrolled recurrence (seq is small and static).  One small bf16
    # matmul + one masked select + one stacked gate block per step.
    for t in range(seq):
        xp_t = xp_ref[t * B2:(t + 1) * B2, :]               # (2B, 8H)
        if t == 0:
            s = xp_t                                         # h0 == 0: skip matmul
        else:
            s = xp_t + jnp.dot(h_bf, whhc_ref[...],
                               preferred_element_type=jnp.float32)
        g = jnp.where(dir_mask, s[:, 0:4 * H], s[:, 4 * H:8 * H])   # (2B, 4H)
        h, c = gates_to_hc(g, c)
        # Folded-head contraction accumulated in-loop (replaces hs + epilogue).
        acc = acc + h * vh_ref[t * B2:(t + 1) * B2, :]
        h_bf = h.astype(jnp.bfloat16)

    # sigmoid(w2 @ (w1 @ flat(hs) + b1) + b2) == sigmoid(sum(hs * v) + const)
    row = jnp.sum(acc, axis=0, keepdims=True)                # (1, H)
    total = jnp.sum(row, axis=1, keepdims=True)              # (1, 1)
    o_ref[...] = _sigmoid(total + const_ref[...])


# ------------------------- wrapper (glue) -------------------------

def lstm_network_forward(x, kparams):
    seq, B, input_size = x.shape
    # Wrapper-side layout plumbing: per step, stack [fwd time t ; bwd time
    # seq-1-t] rows so the kernel runs a single fused recurrence chain.
    xs = jnp.concatenate([x, x[::-1]], axis=1).reshape(seq * 2 * B, input_size)
    xs = xs.astype(jnp.bfloat16)

    kernel = functools.partial(_fused_kernel, seq, B)
    out = pl.pallas_call(
        kernel,
        out_shape=jax.ShapeDtypeStruct((1, 1), jnp.float32),
        in_specs=[
            _VMEM,   # xs          (seq*2B, in)   bf16
            _VMEM,   # wih_cat_t   (in, 8H)       bf16
            _VMEM,   # b_cat       (1, 8H)        f32
            _VMEM,   # whh_cat_t   (H, 8H)        bf16
            _VMEM,   # vh          (seq*2B, H)    f32  (folded w2@w1)
            _VMEM,   # const       (1, 1)         f32  (w2@b1 + b2)
        ],
        out_specs=_VMEM,
        scratch_shapes=[
            pltpu.VMEM((seq * 2 * B, 8 * H), jnp.float32),   # hoisted input proj
        ],
    )(xs, kparams["wih_cat_t"], kparams["b_cat"], kparams["whh_cat_t"],
      kparams["vh"], kparams["const"])
    return out.reshape(1)   # matches PyTorch output shape (1,)


# ------------------------- params -------------------------

def init_params(key, input_size, seq_len, batch):
    """Raw PyTorch-layout parameters."""
    linear_dim = seq_len * batch * 2 * H
    ks = jax.random.split(key, 12)

    def u(k, shape, bound):
        return jax.random.uniform(k, shape, jnp.float32, -bound, bound)

    lb = 1.0 / float(H) ** 0.5
    raw = {
        "wih_f": u(ks[0], (4 * H, input_size), lb),
        "whh_f": u(ks[1], (4 * H, H), lb),
        "bih_f": u(ks[2], (4 * H,), lb),
        "bhh_f": u(ks[3], (4 * H,), lb),
        "wih_b": u(ks[4], (4 * H, input_size), lb),
        "whh_b": u(ks[5], (4 * H, H), lb),
        "bih_b": u(ks[6], (4 * H,), lb),
        "bhh_b": u(ks[7], (4 * H,), lb),
    }
    l1b = 1.0 / float(linear_dim) ** 0.5
    raw["w1"] = u(ks[8], (D1, linear_dim), l1b)
    raw["b1"] = u(ks[9], (D1,), l1b)
    l2b = 1.0 / float(D1) ** 0.5
    raw["w2"] = u(ks[10], (1, D1), l2b)
    raw["b2"] = u(ks[11], (1,), l2b)
    return raw


def prepare_kernel_params(raw, seq_len, batch):
    """One-time host-side repacking into kernel-friendly layouts."""
    wih_cat_t = jnp.concatenate([raw["wih_f"].T, raw["wih_b"].T],
                                axis=1).astype(jnp.bfloat16)          # (in, 8H)
    b_cat = jnp.concatenate([raw["bih_f"] + raw["bhh_f"],
                             raw["bih_b"] + raw["bhh_b"]]).reshape(1, 8 * H)
    whh_cat_t = jnp.concatenate([raw["whh_f"].T, raw["whh_b"].T],
                                axis=1).astype(jnp.bfloat16)          # (H, 8H)
    # Fold linear2 into linear1 (no activation between them in the module):
    # w2 @ (w1 @ flat + b1) + b2 == (w2@w1) @ flat + (w2@b1 + b2)
    v = (raw["w2"] @ raw["w1"]).reshape(seq_len, batch, 2, H)          # (t,b,dir,h)
    vh = jnp.concatenate([v[:, :, 0, :],        # fwd rows for step t -> time t
                          v[::-1, :, 1, :]],    # bwd rows for step t -> time seq-1-t
                         axis=1).reshape(seq_len * 2 * batch, H)
    const = (raw["w2"] @ raw["b1"] + raw["b2"]).reshape(1, 1)
    return {
        "wih_cat_t": wih_cat_t,
        "b_cat": b_cat,
        "whh_cat_t": whh_cat_t,
        "vh": vh,
        "const": const,
    }


# ------------------------- pure-JAX reference -------------------------

def reference_forward(x, raw):
    seq, B, _ = x.shape

    def run_dir(xs, wih, whh, bih, bhh):
        wih_t, whh_t = wih.T, whh.T
        b = (bih + bhh).reshape(1, -1)

        def step(carry, x_t):
            h, c = carry
            gates = x_t @ wih_t + h @ whh_t + b
            i_g = jax.nn.sigmoid(gates[:, :H])
            f_g = jax.nn.sigmoid(gates[:, H:2 * H])
            g_g = jnp.tanh(gates[:, 2 * H:3 * H])
            o_g = jax.nn.sigmoid(gates[:, 3 * H:])
            c = f_g * c + i_g * g_g
            h = o_g * jnp.tanh(c)
            return (h, c), h

        init = (jnp.zeros((B, H), jnp.float32), jnp.zeros((B, H), jnp.float32))
        _, hs = lax.scan(step, init, xs)
        return hs

    hs_f = run_dir(x, raw["wih_f"], raw["whh_f"], raw["bih_f"], raw["bhh_f"])
    hs_b = run_dir(x[::-1], raw["wih_b"], raw["whh_b"],
                   raw["bih_b"], raw["bhh_b"])[::-1]
    hs = jnp.concatenate([hs_f, hs_b], axis=-1)
    flat = hs.reshape(-1)
    y1 = raw["w1"] @ flat + raw["b1"]
    y2 = raw["w2"] @ y1 + raw["b2"]
    return jax.nn.sigmoid(y2)


# ------------------------- main -------------------------

if __name__ == "__main__":
    seq_len, batch, input_size = 8, 2, 16      # linear_dim = 8*2*256 = 4096
    key = jax.random.PRNGKey(0)
    kx, kp = jax.random.split(key)

    x = jax.random.normal(kx, (seq_len, batch, input_size), jnp.float32)
    raw = init_params(kp, input_size, seq_len, batch)
    kparams = prepare_kernel_params(raw, seq_len, batch)

    out = jax.block_until_ready(lstm_network_forward(x, kparams))
    ref = jax.block_until_ready(reference_forward(x, raw))

    assert out.shape == (1,), out.shape
    assert bool(jnp.isfinite(out).all())
    assert float(jnp.max(jnp.abs(out - ref))) < 5e-2, (out, ref)
    print("KERNEL_OK")
</pallas_src>

<mosaic_0001>
module attributes {stable_mosaic.version = 11 : i64} {
  func.func @_fused_kernel(%arg0: memref<32x16xbf16, #tpu.memory_space<vmem>>, %arg1: memref<16x1024xbf16, #tpu.memory_space<vmem>>, %arg2: memref<1x1024xf32, #tpu.memory_space<vmem>>, %arg3: memref<128x1024xbf16, #tpu.memory_space<vmem>>, %arg4: memref<32x128xf32, #tpu.memory_space<vmem>>, %arg5: memref<1x1xf32, #tpu.memory_space<vmem>>, %arg6: memref<1x1xf32, #tpu.memory_space<vmem>>, %arg7: memref<32x1024xf32, #tpu.memory_space<vmem>>) attributes {dimension_semantics = [], scalar_prefetch = 0 : i64, scratch_operands = 1 : i64, tpu.core_type = #tpu.core_type<tc>} {
    %c0 = arith.constant 0 : index
    %c0_0 = arith.constant 0 : index
    %0 = vector.load %arg0[%c0, %c0_0] : memref<32x16xbf16, #tpu.memory_space<vmem>>, vector<32x16xbf16>
    %c0_1 = arith.constant 0 : index
    %c0_2 = arith.constant 0 : index
    %1 = vector.load %arg1[%c0_1, %c0_2] : memref<16x1024xbf16, #tpu.memory_space<vmem>>, vector<16x1024xbf16>
    %cst = arith.constant dense<0.000000e+00> : vector<32x1024xf32>
    %2 = tpu.matmul %0, %1, %cst {dimension_numbers = #tpu.dot_dimension_numbers<[1], [0], [0], [1], [0, 0, 1, 1], [], []>} : vector<32x16xbf16>, vector<16x1024xbf16>, vector<32x1024xf32> -> vector<32x1024xf32>
    %c0_3 = arith.constant 0 : index
    %c0_4 = arith.constant 0 : index
    %3 = vector.load %arg2[%c0_3, %c0_4] : memref<1x1024xf32, #tpu.memory_space<vmem>>, vector<1x1024xf32>
    %4 = vector.broadcast %3 : vector<1x1024xf32> to vector<32x1024xf32>
    %5 = arith.addf %2, %4 : vector<32x1024xf32>
    %c0_5 = arith.constant 0 : index
    %c0_6 = arith.constant 0 : index
    %6 = vector.load %arg7[%c0_5, %c0_6] : memref<32x1024xf32, #tpu.memory_space<vmem>>, vector<32x1024xf32>
    tpu.vector_store %arg7[%c0_5, %c0_6], %5 {strides = array<i32>} : memref<32x1024xf32, #tpu.memory_space<vmem>>, vector<32x1024xf32>,
    %7 = tpu.iota {dimensions = array<i32: 0>} : vector<4x512xi32>
    %c2_i32 = arith.constant 2 : i32
    %8 = vector.broadcast %c2_i32 : i32 to vector<4x512xi32>
    %9 = arith.cmpi slt, %7, %8 : vector<4x512xi32>
    %cst_7 = arith.constant 0.000000e+00 : f32
    %10 = vector.broadcast %cst_7 : f32 to vector<4x128xf32>
    %cst_8 = arith.constant 0.000000e+00 : f32
    %11 = vector.broadcast %cst_8 : f32 to vector<4x128xf32>
    %c0_9 = arith.constant 0 : index
    %c0_10 = arith.constant 0 : index
    %12 = vector.load %arg7[%c0_9, %c0_10] : memref<32x1024xf32, #tpu.memory_space<vmem>>, vector<4x1024xf32>
    %13 = vector.extract_strided_slice %12 {offsets = [0, 0], sizes = [4, 512], strides = [1, 1]} : vector<4x1024xf32> to vector<4x512xf32>
    %14 = vector.extract_strided_slice %12 {offsets = [0, 512], sizes = [4, 512], strides = [1, 1]} : vector<4x1024xf32> to vector<4x512xf32>
    %15 = arith.select %9, %13, %14 : vector<4x512xi1>, vector<4x512xf32>
    %16 = vector.extract_strided_slice %15 {offsets = [0, 0], sizes = [4, 128], strides = [1, 1]} : vector<4x512xf32> to vector<4x128xf32>
    %cst_11 = arith.constant 5.000000e-01 : f32
    %17 = vector.broadcast %cst_11 : f32 to vector<4x128xf32>
    %18 = arith.mulf %17, %16 : vector<4x128xf32>
    %19 = math.tanh %18 : vector<4x128xf32>
    %cst_12 = arith.constant 1.000000e+00 : f32
    %20 = vector.broadcast %cst_12 : f32 to vector<4x128xf32>
    %21 = arith.addf %19, %20 : vector<4x128xf32>
    %cst_13 = arith.constant 5.000000e-01 : f32
    %22 = vector.broadcast %cst_13 : f32 to vector<4x128xf32>
    %23 = arith.mulf %22, %21 : vector<4x128xf32>
    %24 = vector.extract_strided_slice %15 {offsets = [0, 128], sizes = [4, 128], strides = [1, 1]} : vector<4x512xf32> to vector<4x128xf32>
    %cst_14 = arith.constant 5.000000e-01 : f32
    %25 = vector.broadcast %cst_14 : f32 to vector<4x128xf32>
    %26 = arith.mulf %25, %24 : vector<4x128xf32>
    %27 = math.tanh %26 : vector<4x128xf32>
    %cst_15 = arith.constant 1.000000e+00 : f32
    %28 = vector.broadcast %cst_15 : f32 to vector<4x128xf32>
    %29 = arith.addf %27, %28 : vector<4x128xf32>
    %cst_16 = arith.constant 5.000000e-01 : f32
    %30 = vector.broadcast %cst_16 : f32 to vector<4x128xf32>
    %31 = arith.mulf %30, %29 : vector<4x128xf32>
    %32 = vector.extract_strided_slice %15 {offsets = [0, 256], sizes = [4, 128], strides = [1, 1]} : vector<4x512xf32> to vector<4x128xf32>
    %33 = math.tanh %32 : vector<4x128xf32>
    %34 = vector.extract_strided_slice %15 {offsets = [0, 384], sizes = [4, 128], strides = [1, 1]} : vector<4x512xf32> to vector<4x128xf32>
    %cst_17 = arith.constant 5.000000e-01 : f32
    %35 = vector.broadcast %cst_17 : f32 to vector<4x128xf32>
    %36 = arith.mulf %35, %34 : vector<4x128xf32>
    %37 = math.tanh %36 : vector<4x128xf32>
    %cst_18 = arith.constant 1.000000e+00 : f32
    %38 = vector.broadcast %cst_18 : f32 to vector<4x128xf32>
    %39 = arith.addf %37, %38 : vector<4x128xf32>
    %cst_19 = arith.constant 5.000000e-01 : f32
    %40 = vector.broadcast %cst_19 : f32 to vector<4x128xf32>
    %41 = arith.mulf %40, %39 : vector<4x128xf32>
    %42 = arith.mulf %31, %10 : vector<4x128xf32>
    %43 = arith.mulf %23, %33 : vector<4x128xf32>
    %44 = arith.addf %42, %43 : vector<4x128xf32>
    %45 = math.tanh %44 : vector<4x128xf32>
    %46 = arith.mulf %41, %45 : vector<4x128xf32>
    %c0_20 = arith.constant 0 : index
    %c0_21 = arith.constant 0 : index
    %47 = vector.load %arg4[%c0_20, %c0_21] : memref<32x128xf32, #tpu.memory_space<vmem>>, vector<4x128xf32>
    %48 = arith.mulf %46, %47 : vector<4x128xf32>
    %49 = arith.addf %11, %48 : vector<4x128xf32>
    %50 = arith.truncf %46 : vector<4x128xf32> to vector<4x128xbf16>
    %c4 = arith.constant 4 : index
    %c0_22 = arith.constant 0 : index
    %51 = vector.load %arg7[%c4, %c0_22] : memref<32x1024xf32, #tpu.memory_space<vmem>>, vector<4x1024xf32>
    %c0_23 = arith.constant 0 : index
    %c0_24 = arith.constant 0 : index
    %52 = vector.load %arg3[%c0_23, %c0_24] : memref<128x1024xbf16, #tpu.memory_space<vmem>>, vector<128x1024xbf16>
    %cst_25 = arith.constant dense<0.000000e+00> : vector<4x1024xf32>
    %53 = tpu.matmul %50, %52, %cst_25 {dimension_numbers = #tpu.dot_dimension_numbers<[1], [0], [0], [1], [0, 0, 1, 1], [], []>} : vector<4x128xbf16>, vector<128x1024xbf16>, vector<4x1024xf32> -> vector<4x1024xf32>
    %54 = arith.addf %51, %53 : vector<4x1024xf32>
    %55 = vector.extract_strided_slice %54 {offsets = [0, 0], sizes = [4, 512], strides = [1, 1]} : vector<4x1024xf32> to vector<4x512xf32>
    %56 = vector.extract_strided_slice %54 {offsets = [0, 512], sizes = [4, 512], strides = [1, 1]} : vector<4x1024xf32> to vector<4x512xf32>
    %57 = arith.select %9, %55, %56 : vector<4x512xi1>, vector<4x512xf32>
    %58 = vector.extract_strided_slice %57 {offsets = [0, 0], sizes = [4, 128], strides = [1, 1]} : vector<4x512xf32> to vector<4x128xf32>
    %cst_26 = arith.constant 5.000000e-01 : f32
    %59 = vector.broadcast %cst_26 : f32 to vector<4x128xf32>
    %60 = arith.mulf %59, %58 : vector<4x128xf32>
    %61 = math.tanh %60 : vector<4x128xf32>
    %cst_27 = arith.constant 1.000000e+00 : f32
    %62 = vector.broadcast %cst_27 : f32 to vector<4x128xf32>
    %63 = arith.addf %61, %62 : vector<4x128xf32>
    %cst_28 = arith.constant 5.000000e-01 : f32
    %64 = vector.broadcast %cst_28 : f32 to vector<4x128xf32>
    %65 = arith.mulf %64, %63 : vector<4x128xf32>
    %66 = vector.extract_strided_slice %57 {offsets = [0, 128], sizes = [4, 128], strides = [1, 1]} : vector<4x512xf32> to vector<4x128xf32>
    %cst_29 = arith.constant 5.000000e-01 : f32
    %67 = vector.broadcast %cst_29 : f32 to vector<4x128xf32>
    %68 = arith.mulf %67, %66 : vector<4x128xf32>
    %69 = math.tanh %68 : vector<4x128xf32>
    %cst_30 = arith.constant 1.000000e+00 : f32
    %70 = vector.broadcast %cst_30 : f32 to vector<4x128xf32>
    %71 = arith.addf %69, %70 : vector<4x128xf32>
    %cst_31 = arith.constant 5.000000e-01 : f32
    %72 = vector.broadcast %cst_31 : f32 to vector<4x128xf32>
    %73 = arith.mulf %72, %71 : vector<4x128xf32>
    %74 = vector.extract_strided_slice %57 {offsets = [0, 256], sizes = [4, 128], strides = [1, 1]} : vector<4x512xf32> to vector<4x128xf32>
    %75 = math.tanh %74 : vector<4x128xf32>
    %76 = vector.extract_strided_slice %57 {offsets = [0, 384], sizes = [4, 128], strides = [1, 1]} : vector<4x512xf32> to vector<4x128xf32>
    %cst_32 = arith.constant 5.000000e-01 : f32
    %77 = vector.broadcast %cst_32 : f32 to vector<4x128xf32>
    %78 = arith.mulf %77, %76 : vector<4x128xf32>
    %79 = math.tanh %78 : vector<4x128xf32>
    %cst_33 = arith.constant 1.000000e+00 : f32
    %80 = vector.broadcast %cst_33 : f32 to vector<4x128xf32>
    %81 = arith.addf %79, %80 : vector<4x128xf32>
    %cst_34 = arith.constant 5.000000e-01 : f32
    %82 = vector.broadcast %cst_34 : f32 to vector<4x128xf32>
    %83 = arith.mulf %82, %81 : vector<4x128xf32>
    %84 = arith.mulf %73, %44 : vector<4x128xf32>
    %85 = arith.mulf %65, %75 : vector<4x128xf32>
    %86 = arith.addf %84, %85 : vector<4x128xf32>
    %87 = math.tanh %86 : vector<4x128xf32>
    %88 = arith.mulf %83, %87 : vector<4x128xf32>
    %c4_35 = arith.constant 4 : index
    %c0_36 = arith.constant 0 : index
    %89 = vector.load %arg4[%c4_35, %c0_36] : memref<32x128xf32, #tpu.memory_space<vmem>>, vector<4x128xf32>
    %90 = arith.mulf %88, %89 : vector<4x128xf32>
    %91 = arith.addf %49, %90 : vector<4x128xf32>
    %92 = arith.truncf %88 : vector<4x128xf32> to vector<4x128xbf16>
    %c8 = arith.constant 8 : index
    %c0_37 = arith.constant 0 : index
    %93 = vector.load %arg7[%c8, %c0_37] : memref<32x1024xf32, #tpu.memory_space<vmem>>, vector<4x1024xf32>
    %c0_38 = arith.constant 0 : index
    %c0_39 = arith.constant 0 : index
    %94 = vector.load %arg3[%c0_38, %c0_39] : memref<128x1024xbf16, #tpu.memory_space<vmem>>, vector<128x1024xbf16>
    %cst_40 = arith.constant dense<0.000000e+00> : vector<4x1024xf32>
    %95 = tpu.matmul %92, %94, %cst_40 {dimension_numbers = #tpu.dot_dimension_numbers<[1], [0], [0], [1], [0, 0, 1, 1], [], []>} : vector<4x128xbf16>, vector<128x1024xbf16>, vector<4x1024xf32> -> vector<4x1024xf32>
    %96 = arith.addf %93, %95 : vector<4x1024xf32>
    %97 = vector.extract_strided_slice %96 {offsets = [0, 0], sizes = [4, 512], strides = [1, 1]} : vector<4x1024xf32> to vector<4x512xf32>
    %98 = vector.extract_strided_slice %96 {offsets = [0, 512], sizes = [4, 512], strides = [1, 1]} : vector<4x1024xf32> to vector<4x512xf32>
    %99 = arith.select %9, %97, %98 : vector<4x512xi1>, vector<4x512xf32>
    %100 = vector.extract_strided_slice %99 {offsets = [0, 0], sizes = [4, 128], strides = [1, 1]} : vector<4x512xf32> to vector<4x128xf32>
    %cst_41 = arith.constant 5.000000e-01 : f32
    %101 = vector.broadcast %cst_41 : f32 to vector<4x128xf32>
    %102 = arith.mulf %101, %100 : vector<4x128xf32>
    %103 = math.tanh %102 : vector<4x128xf32>
    %cst_42 = arith.constant 1.000000e+00 : f32
    %104 = vector.broadcast %cst_42 : f32 to vector<4x128xf32>
    %105 = arith.addf %103, %104 : vector<4x128xf32>
    %cst_43 = arith.constant 5.000000e-01 : f32
    %106 = vector.broadcast %cst_43 : f32 to vector<4x128xf32>
    %107 = arith.mulf %106, %105 : vector<4x128xf32>
    %108 = vector.extract_strided_slice %99 {offsets = [0, 128], sizes = [4, 128], strides = [1, 1]} : vector<4x512xf32> to vector<4x128xf32>
    %cst_44 = arith.constant 5.000000e-01 : f32
    %109 = vector.broadcast %cst_44 : f32 to vector<4x128xf32>
    %110 = arith.mulf %109, %108 : vector<4x128xf32>
    %111 = math.tanh %110 : vector<4x128xf32>
    %cst_45 = arith.constant 1.000000e+00 : f32
    %112 = vector.broadcast %cst_45 : f32 to vector<4x128xf32>
    %113 = arith.addf %111, %112 : vector<4x128xf32>
    %cst_46 = arith.constant 5.000000e-01 : f32
    %114 = vector.broadcast %cst_46 : f32 to vector<4x128xf32>
    %115 = arith.mulf %114, %113 : vector<4x128xf32>
    %116 = vector.extract_strided_slice %99 {offsets = [0, 256], sizes = [4, 128], strides = [1, 1]} : vector<4x512xf32> to vector<4x128xf32>
    %117 = math.tanh %116 : vector<4x128xf32>
    %118 = vector.extract_strided_slice %99 {offsets = [0, 384], sizes = [4, 128], strides = [1, 1]} : vector<4x512xf32> to vector<4x128xf32>
    %cst_47 = arith.constant 5.000000e-01 : f32
    %119 = vector.broadcast %cst_47 : f32 to vector<4x128xf32>
    %120 = arith.mulf %119, %118 : vector<4x128xf32>
    %121 = math.tanh %120 : vector<4x128xf32>
    %cst_48 = arith.constant 1.000000e+00 : f32
    %122 = vector.broadcast %cst_48 : f32 to vector<4x128xf32>
    %123 = arith.addf %121, %122 : vector<4x128xf32>
    %cst_49 = arith.constant 5.000000e-01 : f32
    %124 = vector.broadcast %cst_49 : f32 to vector<4x128xf32>
    %125 = arith.mulf %124, %123 : vector<4x128xf32>
    %126 = arith.mulf %115, %86 : vector<4x128xf32>
    %127 = arith.mulf %107, %117 : vector<4x128xf32>
    %128 = arith.addf %126, %127 : vector<4x128xf32>
    %129 = math.tanh %128 : vector<4x128xf32>
    %130 = arith.mulf %125, %129 : vector<4x128xf32>
    %c8_50 = arith.constant 8 : index
    %c0_51 = arith.constant 0 : index
    %131 = vector.load %arg4[%c8_50, %c0_51] : memref<32x128xf32, #tpu.memory_space<vmem>>, vector<4x128xf32>
    %132 = arith.mulf %130, %131 : vector<4x128xf32>
    %133 = arith.addf %91, %132 : vector<4x128xf32>
    %134 = arith.truncf %130 : vector<4x128xf32> to vector<4x128xbf16>
    %c12 = arith.constant 12 : index
    %c0_52 = arith.constant 0 : index
    %135 = vector.load %arg7[%c12, %c0_52] : memref<32x1024xf32, #tpu.memory_space<vmem>>, vector<4x1024xf32>
    %c0_53 = arith.constant 0 : index
    %c0_54 = arith.constant 0 : index
    %136 = vector.load %arg3[%c0_53, %c0_54] : memref<128x1024xbf16, #tpu.memory_space<vmem>>, vector<128x1024xbf16>
    %cst_55 = arith.constant dense<0.000000e+00> : vector<4x1024xf32>
    %137 = tpu.matmul %134, %136, %cst_55 {dimension_numbers = #tpu.dot_dimension_numbers<[1], [0], [0], [1], [0, 0, 1, 1], [], []>} : vector<4x128xbf16>, vector<128x1024xbf16>, vector<4x1024xf32> -> vector<4x1024xf32>
    %138 = arith.addf %135, %137 : vector<4x1024xf32>
    %139 = vector.extract_strided_slice %138 {offsets = [0, 0], sizes = [4, 512], strides = [1, 1]} : vector<4x1024xf32> to vector<4x512xf32>
    %140 = vector.extract_strided_slice %138 {offsets = [0, 512], sizes = [4, 512], strides = [1, 1]} : vector<4x1024xf32> to vector<4x512xf32>
    %141 = arith.select %9, %139, %140 : vector<4x512xi1>, vector<4x512xf32>
    %142 = vector.extract_strided_slice %141 {offsets = [0, 0], sizes = [4, 128], strides = [1, 1]} : vector<4x512xf32> to vector<4x128xf32>
    %cst_56 = arith.constant 5.000000e-01 : f32
    %143 = vector.broadcast %cst_56 : f32 to vector<4x128xf32>
    %144 = arith.mulf %143, %142 : vector<4x128xf32>
    %145 = math.tanh %144 : vector<4x128xf32>
    %cst_57 = arith.constant 1.000000e+00 : f32
    %146 = vector.broadcast %cst_57 : f32 to vector<4x128xf32>
    %147 = arith.addf %145, %146 : vector<4x128xf32>
    %cst_58 = arith.constant 5.000000e-01 : f32
    %148 = vector.broadcast %cst_58 : f32 to vector<4x128xf32>
    %149 = arith.mulf %148, %147 : vector<4x128xf32>
    %150 = vector.extract_strided_slice %141 {offsets = [0, 128], sizes = [4, 128], strides = [1, 1]} : vector<4x512xf32> to vector<4x128xf32>
    %cst_59 = arith.constant 5.000000e-01 : f32
    %151 = vector.broadcast %cst_59 : f32 to vector<4x128xf32>
    %152 = arith.mulf %151, %150 : vector<4x128xf32>
    %153 = math.tanh %152 : vector<4x128xf32>
    %cst_60 = arith.constant 1.000000e+00 : f32
    %154 = vector.broadcast %cst_60 : f32 to vector<4x128xf32>
    %155 = arith.addf %153, %154 : vector<4x128xf32>
    %cst_61 = arith.constant 5.000000e-01 : f32
    %156 = vector.broadcast %cst_61 : f32 to vector<4x128xf32>
    %157 = arith.mulf %156, %155 : vector<4x128xf32>
    %158 = vector.extract_strided_slice %141 {offsets = [0, 256], sizes = [4, 128], strides = [1, 1]} : vector<4x512xf32> to vector<4x128xf32>
    %159 = math.tanh %158 : vector<4x128xf32>
    %160 = vector.extract_strided_slice %141 {offsets = [0, 384], sizes = [4, 128], strides = [1, 1]} : vector<4x512xf32> to vector<4x128xf32>
    %cst_62 = arith.constant 5.000000e-01 : f32
    %161 = vector.broadcast %cst_62 : f32 to vector<4x128xf32>
    %162 = arith.mulf %161, %160 : vector<4x128xf32>
    %163 = math.tanh %162 : vector<4x128xf32>
    %cst_63 = arith.constant 1.000000e+00 : f32
    %164 = vector.broadcast %cst_63 : f32 to vector<4x128xf32>
    %165 = arith.addf %163, %164 : vector<4x128xf32>
    %cst_64 = arith.constant 5.000000e-01 : f32
    %166 = vector.broadcast %cst_64 : f32 to vector<4x128xf32>
    %167 = arith.mulf %166, %165 : vector<4x128xf32>
    %168 = arith.mulf %157, %128 : vector<4x128xf32>
    %169 = arith.mulf %149, %159 : vector<4x128xf32>
    %170 = arith.addf %168, %169 : vector<4x128xf32>
    %171 = math.tanh %170 : vector<4x128xf32>
    %172 = arith.mulf %167, %171 : vector<4x128xf32>
    %c12_65 = arith.constant 12 : index
    %c0_66 = arith.constant 0 : index
    %173 = vector.load %arg4[%c12_65, %c0_66] : memref<32x128xf32, #tpu.memory_space<vmem>>, vector<4x128xf32>
    %174 = arith.mulf %172, %173 : vector<4x128xf32>
    %175 = arith.addf %133, %174 : vector<4x128xf32>
    %176 = arith.truncf %172 : vector<4x128xf32> to vector<4x128xbf16>
    %c16 = arith.constant 16 : index
    %c0_67 = arith.constant 0 : index
    %177 = vector.load %arg7[%c16, %c0_67] : memref<32x1024xf32, #tpu.memory_space<vmem>>, vector<4x1024xf32>
    %c0_68 = arith.constant 0 : index
    %c0_69 = arith.constant 0 : index
    %178 = vector.load %arg3[%c0_68, %c0_69] : memref<128x1024xbf16, #tpu.memory_space<vmem>>, vector<128x1024xbf16>
    %cst_70 = arith.constant dense<0.000000e+00> : vector<4x1024xf32>
    %179 = tpu.matmul %176, %178, %cst_70 {dimension_numbers = #tpu.dot_dimension_numbers<[1], [0], [0], [1], [0, 0, 1, 1], [], []>} : vector<4x128xbf16>, vector<128x1024xbf16>, vector<4x1024xf32> -> vector<4x1024xf32>
    %180 = arith.addf %177, %179 : vector<4x1024xf32>
    %181 = vector.extract_strided_slice %180 {offsets = [0, 0], sizes = [4, 512], strides = [1, 1]} : vector<4x1024xf32> to vector<4x512xf32>
    %182 = vector.extract_strided_slice %180 {offsets = [0, 512], sizes = [4, 512], strides = [1, 1]} : vector<4x1024xf32> to vector<4x512xf32>
    %183 = arith.select %9, %181, %182 : vector<4x512xi1>, vector<4x512xf32>
    %184 = vector.extract_strided_slice %183 {offsets = [0, 0], sizes = [4, 128], strides = [1, 1]} : vector<4x512xf32> to vector<4x128xf32>
    %cst_71 = arith.constant 5.000000e-01 : f32
    %185 = vector.broadcast %cst_71 : f32 to vector<4x128xf32>
    %186 = arith.mulf %185, %184 : vector<4x128xf32>
    %187 = math.tanh %186 : vector<4x128xf32>
    %cst_72 = arith.constant 1.000000e+00 : f32
    %188 = vector.broadcast %cst_72 : f32 to vector<4x128xf32>
    %189 = arith.addf %187, %188 : vector<4x128xf32>
    %cst_73 = arith.constant 5.000000e-01 : f32
    %190 = vector.broadcast %cst_73 : f32 to vector<4x128xf32>
    %191 = arith.mulf %190, %189 : vector<4x128xf32>
    %192 = vector.extract_strided_slice %183 {offsets = [0, 128], sizes = [4, 128], strides = [1, 1]} : vector<4x512xf32> to vector<4x128xf32>
    %cst_74 = arith.constant 5.000000e-01 : f32
    %193 = vector.broadcast %cst_74 : f32 to vector<4x128xf32>
    %194 = arith.mulf %193, %192 : vector<4x128xf32>
    %195 = math.tanh %194 : vector<4x128xf32>
    %cst_75 = arith.constant 1.000000e+00 : f32
    %196 = vector.broadcast %cst_75 : f32 to vector<4x128xf32>
    %197 = arith.addf %195, %196 : vector<4x128xf32>
    %cst_76 = arith.constant 5.000000e-01 : f32
    %198 = vector.broadcast %cst_76 : f32 to vector<4x128xf32>
    %199 = arith.mulf %198, %197 : vector<4x128xf32>
    %200 = vector.extract_strided_slice %183 {offsets = [0, 256], sizes = [4, 128], strides = [1, 1]} : vector<4x512xf32> to vector<4x128xf32>
    %201 = math.tanh %200 : vector<4x128xf32>
    %202 = vector.extract_strided_slice %183 {offsets = [0, 384], sizes = [4, 128], strides = [1, 1]} : vector<4x512xf32> to vector<4x128xf32>
    %cst_77 = arith.constant 5.000000e-01 : f32
    %203 = vector.broadcast %cst_77 : f32 to vector<4x128xf32>
    %204 = arith.mulf %203, %202 : vector<4x128xf32>
    %205 = math.tanh %204 : vector<4x128xf32>
    %cst_78 = arith.constant 1.000000e+00 : f32
    %206 = vector.broadcast %cst_78 : f32 to vector<4x128xf32>
    %207 = arith.addf %205, %206 : vector<4x128xf32>
    %cst_79 = arith.constant 5.000000e-01 : f32
    %208 = vector.broadcast %cst_79 : f32 to vector<4x128xf32>
    %209 = arith.mulf %208, %207 : vector<4x128xf32>
    %210 = arith.mulf %199, %170 : vector<4x128xf32>
    %211 = arith.mulf %191, %201 : vector<4x128xf32>
    %212 = arith.addf %210, %211 : vector<4x128xf32>
    %213 = math.tanh %212 : vector<4x128xf32>
    %214 = arith.mulf %209, %213 : vector<4x128xf32>
    %c16_80 = arith.constant 16 : index
    %c0_81 = arith.constant 0 : index
    %215 = vector.load %arg4[%c16_80, %c0_81] : memref<32x128xf32, #tpu.memory_space<vmem>>, vector<4x128xf32>
    %216 = arith.mulf %214, %215 : vector<4x128xf32>
    %217 = arith.addf %175, %216 : vector<4x128xf32>
    %218 = arith.truncf %214 : vector<4x128xf32> to vector<4x128xbf16>
    %c20 = arith.constant 20 : index
    %c0_82 = arith.constant 0 : index
    %219 = vector.load %arg7[%c20, %c0_82] : memref<32x1024xf32, #tpu.memory_space<vmem>>, vector<4x1024xf32>
    %c0_83 = arith.constant 0 : index
    %c0_84 = arith.constant 0 : index
    %220 = vector.load %arg3[%c0_83, %c0_84] : memref<128x1024xbf16, #tpu.memory_space<vmem>>, vector<128x1024xbf16>
    %cst_85 = arith.constant dense<0.000000e+00> : vector<4x1024xf32>
    %221 = tpu.matmul %218, %220, %cst_85 {dimension_numbers = #tpu.dot_dimension_numbers<[1], [0], [0], [1], [0, 0, 1, 1], [], []>} : vector<4x128xbf16>, vector<128x1024xbf16>, vector<4x1024xf32> -> vector<4x1024xf32>
    %222 = arith.addf %219, %221 : vector<4x1024xf32>
    %223 = vector.extract_strided_slice %222 {offsets = [0, 0], sizes = [4, 512], strides = [1, 1]} : vector<4x1024xf32> to vector<4x512xf32>
    %224 = vector.extract_strided_slice %222 {offsets = [0, 512], sizes = [4, 512], strides = [1, 1]} : vector<4x1024xf32> to vector<4x512xf32>
    %225 = arith.select %9, %223, %224 : vector<4x512xi1>, vector<4x512xf32>
    %226 = vector.extract_strided_slice %225 {offsets = [0, 0], sizes = [4, 128], strides = [1, 1]} : vector<4x512xf32> to vector<4x128xf32>
    %cst_86 = arith.constant 5.000000e-01 : f32
    %227 = vector.broadcast %cst_86 : f32 to vector<4x128xf32>
    %228 = arith.mulf %227, %226 : vector<4x128xf32>
    %229 = math.tanh %228 : vector<4x128xf32>
    %cst_87 = arith.constant 1.000000e+00 : f32
    %230 = vector.broadcast %cst_87 : f32 to vector<4x128xf32>
    %231 = arith.addf %229, %230 : vector<4x128xf32>
    %cst_88 = arith.constant 5.000000e-01 : f32
    %232 = vector.broadcast %cst_88 : f32 to vector<4x128xf32>
    %233 = arith.mulf %232, %231 : vector<4x128xf32>
    %234 = vector.extract_strided_slice %225 {offsets = [0, 128], sizes = [4, 128], strides = [1, 1]} : vector<4x512xf32> to vector<4x128xf32>
    %cst_89 = arith.constant 5.000000e-01 : f32
    %235 = vector.broadcast %cst_89 : f32 to vector<4x128xf32>
    %236 = arith.mulf %235, %234 : vector<4x128xf32>
    %237 = math.tanh %236 : vector<4x128xf32>
    %cst_90 = arith.constant 1.000000e+00 : f32
    %238 = vector.broadcast %cst_90 : f32 to vector<4x128xf32>
    %239 = arith.addf %237, %238 : vector<4x128xf32>
    %cst_91 = arith.constant 5.000000e-01 : f32
    %240 = vector.broadcast %cst_91 : f32 to vector<4x128xf32>
    %241 = arith.mulf %240, %239 : vector<4x128xf32>
    %242 = vector.extract_strided_slice %225 {offsets = [0, 256], sizes = [4, 128], strides = [1, 1]} : vector<4x512xf32> to vector<4x128xf32>
    %243 = math.tanh %242 : vector<4x128xf32>
    %244 = vector.extract_strided_slice %225 {offsets = [0, 384], sizes = [4, 128], strides = [1, 1]} : vector<4x512xf32> to vector<4x128xf32>
    %cst_92 = arith.constant 5.000000e-01 : f32
    %245 = vector.broadcast %cst_92 : f32 to vector<4x128xf32>
    %246 = arith.mulf %245, %244 : vector<4x128xf32>
    %247 = math.tanh %246 : vector<4x128xf32>
    %cst_93 = arith.constant 1.000000e+00 : f32
    %248 = vector.broadcast %cst_93 : f32 to vector<4x128xf32>
    %249 = arith.addf %247, %248 : vector<4x128xf32>
    %cst_94 = arith.constant 5.000000e-01 : f32
    %250 = vector.broadcast %cst_94 : f32 to vector<4x128xf32>
    %251 = arith.mulf %250, %249 : vector<4x128xf32>
    %252 = arith.mulf %241, %212 : vector<4x128xf32>
    %253 = arith.mulf %233, %243 : vector<4x128xf32>
    %254 = arith.addf %252, %253 : vector<4x128xf32>
    %255 = math.tanh %254 : vector<4x128xf32>
    %256 = arith.mulf %251, %255 : vector<4x128xf32>
    %c20_95 = arith.constant 20 : index
    %c0_96 = arith.constant 0 : index
    %257 = vector.load %arg4[%c20_95, %c0_96] : memref<32x128xf32, #tpu.memory_space<vmem>>, vector<4x128xf32>
    %258 = arith.mulf %256, %257 : vector<4x128xf32>
    %259 = arith.addf %217, %258 : vector<4x128xf32>
    %260 = arith.truncf %256 : vector<4x128xf32> to vector<4x128xbf16>
    %c24 = arith.constant 24 : index
    %c0_97 = arith.constant 0 : index
    %261 = vector.load %arg7[%c24, %c0_97] : memref<32x1024xf32, #tpu.memory_space<vmem>>, vector<4x1024xf32>
    %c0_98 = arith.constant 0 : index
    %c0_99 = arith.constant 0 : index
    %262 = vector.load %arg3[%c0_98, %c0_99] : memref<128x1024xbf16, #tpu.memory_space<vmem>>, vector<128x1024xbf16>
    %cst_100 = arith.constant dense<0.000000e+00> : vector<4x1024xf32>
    %263 = tpu.matmul %260, %262, %cst_100 {dimension_numbers = #tpu.dot_dimension_numbers<[1], [0], [0], [1], [0, 0, 1, 1], [], []>} : vector<4x128xbf16>, vector<128x1024xbf16>, vector<4x1024xf32> -> vector<4x1024xf32>
    %264 = arith.addf %261, %263 : vector<4x1024xf32>
    %265 = vector.extract_strided_slice %264 {offsets = [0, 0], sizes = [4, 512], strides = [1, 1]} : vector<4x1024xf32> to vector<4x512xf32>
    %266 = vector.extract_strided_slice %264 {offsets = [0, 512], sizes = [4, 512], strides = [1, 1]} : vector<4x1024xf32> to vector<4x512xf32>
    %267 = arith.select %9, %265, %266 : vector<4x512xi1>, vector<4x512xf32>
    %268 = vector.extract_strided_slice %267 {offsets = [0, 0], sizes = [4, 128], strides = [1, 1]} : vector<4x512xf32> to vector<4x128xf32>
    %cst_101 = arith.constant 5.000000e-01 : f32
    %269 = vector.broadcast %cst_101 : f32 to vector<4x128xf32>
    %270 = arith.mulf %269, %268 : vector<4x128xf32>
    %271 = math.tanh %270 : vector<4x128xf32>
    %cst_102 = arith.constant 1.000000e+00 : f32
    %272 = vector.broadcast %cst_102 : f32 to vector<4x128xf32>
    %273 = arith.addf %271, %272 : vector<4x128xf32>
    %cst_103 = arith.constant 5.000000e-01 : f32
    %274 = vector.broadcast %cst_103 : f32 to vector<4x128xf32>
    %275 = arith.mulf %274, %273 : vector<4x128xf32>
    %276 = vector.extract_strided_slice %267 {offsets = [0, 128], sizes = [4, 128], strides = [1, 1]} : vector<4x512xf32> to vector<4x128xf32>
    %cst_104 = arith.constant 5.000000e-01 : f32
    %277 = vector.broadcast %cst_104 : f32 to vector<4x128xf32>
    %278 = arith.mulf %277, %276 : vector<4x128xf32>
    %279 = math.tanh %278 : vector<4x128xf32>
    %cst_105 = arith.constant 1.000000e+00 : f32
    %280 = vector.broadcast %cst_105 : f32 to vector<4x128xf32>
    %281 = arith.addf %279, %280 : vector<4x128xf32>
    %cst_106 = arith.constant 5.000000e-01 : f32
    %282 = vector.broadcast %cst_106 : f32 to vector<4x128xf32>
    %283 = arith.mulf %282, %281 : vector<4x128xf32>
    %284 = vector.extract_strided_slice %267 {offsets = [0, 256], sizes = [4, 128], strides = [1, 1]} : vector<4x512xf32> to vector<4x128xf32>
    %285 = math.tanh %284 : vector<4x128xf32>
    %286 = vector.extract_strided_slice %267 {offsets = [0, 384], sizes = [4, 128], strides = [1, 1]} : vector<4x512xf32> to vector<4x128xf32>
    %cst_107 = arith.constant 5.000000e-01 : f32
    %287 = vector.broadcast %cst_107 : f32 to vector<4x128xf32>
    %288 = arith.mulf %287, %286 : vector<4x128xf32>
    %289 = math.tanh %288 : vector<4x128xf32>
    %cst_108 = arith.constant 1.000000e+00 : f32
    %290 = vector.broadcast %cst_108 : f32 to vector<4x128xf32>
    %291 = arith.addf %289, %290 : vector<4x128xf32>
    %cst_109 = arith.constant 5.000000e-01 : f32
    %292 = vector.broadcast %cst_109 : f32 to vector<4x128xf32>
    %293 = arith.mulf %292, %291 : vector<4x128xf32>
    %294 = arith.mulf %283, %254 : vector<4x128xf32>
    %295 = arith.mulf %275, %285 : vector<4x128xf32>
    %296 = arith.addf %294, %295 : vector<4x128xf32>
    %297 = math.tanh %296 : vector<4x128xf32>
    %298 = arith.mulf %293, %297 : vector<4x128xf32>
    %c24_110 = arith.constant 24 : index
    %c0_111 = arith.constant 0 : index
    %299 = vector.load %arg4[%c24_110, %c0_111] : memref<32x128xf32, #tpu.memory_space<vmem>>, vector<4x128xf32>
    %300 = arith.mulf %298, %299 : vector<4x128xf32>
    %301 = arith.addf %259, %300 : vector<4x128xf32>
    %302 = arith.truncf %298 : vector<4x128xf32> to vector<4x128xbf16>
    %c28 = arith.constant 28 : index
    %c0_112 = arith.constant 0 : index
    %303 = vector.load %arg7[%c28, %c0_112] : memref<32x1024xf32, #tpu.memory_space<vmem>>, vector<4x1024xf32>
    %c0_113 = arith.constant 0 : index
    %c0_114 = arith.constant 0 : index
    %304 = vector.load %arg3[%c0_113, %c0_114] : memref<128x1024xbf16, #tpu.memory_space<vmem>>, vector<128x1024xbf16>
    %cst_115 = arith.constant dense<0.000000e+00> : vector<4x1024xf32>
    %305 = tpu.matmul %302, %304, %cst_115 {dimension_numbers = #tpu.dot_dimension_numbers<[1], [0], [0], [1], [0, 0, 1, 1], [], []>} : vector<4x128xbf16>, vector<128x1024xbf16>, vector<4x1024xf32> -> vector<4x1024xf32>
    %306 = arith.addf %303, %305 : vector<4x1024xf32>
    %307 = vector.extract_strided_slice %306 {offsets = [0, 0], sizes = [4, 512], strides = [1, 1]} : vector<4x1024xf32> to vector<4x512xf32>
    %308 = vector.extract_strided_slice %306 {offsets = [0, 512], sizes = [4, 512], strides = [1, 1]} : vector<4x1024xf32> to vector<4x512xf32>
    %309 = arith.select %9, %307, %308 : vector<4x512xi1>, vector<4x512xf32>
    %310 = vector.extract_strided_slice %309 {offsets = [0, 0], sizes = [4, 128], strides = [1, 1]} : vector<4x512xf32> to vector<4x128xf32>
    %cst_116 = arith.constant 5.000000e-01 : f32
    %311 = vector.broadcast %cst_116 : f32 to vector<4x128xf32>
    %312 = arith.mulf %311, %310 : vector<4x128xf32>
    %313 = math.tanh %312 : vector<4x128xf32>
    %cst_117 = arith.constant 1.000000e+00 : f32
    %314 = vector.broadcast %cst_117 : f32 to vector<4x128xf32>
    %315 = arith.addf %313, %314 : vector<4x128xf32>
    %cst_118 = arith.constant 5.000000e-01 : f32
    %316 = vector.broadcast %cst_118 : f32 to vector<4x128xf32>
    %317 = arith.mulf %316, %315 : vector<4x128xf32>
    %318 = vector.extract_strided_slice %309 {offsets = [0, 128], sizes = [4, 128], strides = [1, 1]} : vector<4x512xf32> to vector<4x128xf32>
    %cst_119 = arith.constant 5.000000e-01 : f32
    %319 = vector.broadcast %cst_119 : f32 to vector<4x128xf32>
    %320 = arith.mulf %319, %318 : vector<4x128xf32>
    %321 = math.tanh %320 : vector<4x128xf32>
    %cst_120 = arith.constant 1.000000e+00 : f32
    %322 = vector.broadcast %cst_120 : f32 to vector<4x128xf32>
    %323 = arith.addf %321, %322 : vector<4x128xf32>
    %cst_121 = arith.constant 5.000000e-01 : f32
    %324 = vector.broadcast %cst_121 : f32 to vector<4x128xf32>
    %325 = arith.mulf %324, %323 : vector<4x128xf32>
    %326 = vector.extract_strided_slice %309 {offsets = [0, 256], sizes = [4, 128], strides = [1, 1]} : vector<4x512xf32> to vector<4x128xf32>
    %327 = math.tanh %326 : vector<4x128xf32>
    %328 = vector.extract_strided_slice %309 {offsets = [0, 384], sizes = [4, 128], strides = [1, 1]} : vector<4x512xf32> to vector<4x128xf32>
    %cst_122 = arith.constant 5.000000e-01 : f32
    %329 = vector.broadcast %cst_122 : f32 to vector<4x128xf32>
    %330 = arith.mulf %329, %328 : vector<4x128xf32>
    %331 = math.tanh %330 : vector<4x128xf32>
    %cst_123 = arith.constant 1.000000e+00 : f32
    %332 = vector.broadcast %cst_123 : f32 to vector<4x128xf32>
    %333 = arith.addf %331, %332 : vector<4x128xf32>
    %cst_124 = arith.constant 5.000000e-01 : f32
    %334 = vector.broadcast %cst_124 : f32 to vector<4x128xf32>
    %335 = arith.mulf %334, %333 : vector<4x128xf32>
    %336 = arith.mulf %325, %296 : vector<4x128xf32>
    %337 = arith.mulf %317, %327 : vector<4x128xf32>
    %338 = arith.addf %336, %337 : vector<4x128xf32>
    %339 = math.tanh %338 : vector<4x128xf32>
    %340 = arith.mulf %335, %339 : vector<4x128xf32>
    %c28_125 = arith.constant 28 : index
    %c0_126 = arith.constant 0 : index
    %341 = vector.load %arg4[%c28_125, %c0_126] : memref<32x128xf32, #tpu.memory_space<vmem>>, vector<4x128xf32>
    %342 = arith.mulf %340, %341 : vector<4x128xf32>
    %343 = arith.addf %301, %342 : vector<4x128xf32>
    %cst_127 = arith.constant dense<0.000000e+00> : vector<128xf32>
    %344 = vector.multi_reduction <add>, %343, %cst_127 [0] : vector<4x128xf32> to vector<128xf32>
    %345 = vector.shape_cast %344 : vector<128xf32> to vector<1x128xf32>
    %cst_128 = arith.constant dense<0.000000e+00> : vector<1xf32>
    %346 = vector.multi_reduction <add>, %345, %cst_128 [1] : vector<1x128xf32> to vector<1xf32>
    %347 = vector.shape_cast %346 : vector<1xf32> to vector<1x1xf32>
    %c0_129 = arith.constant 0 : index
    %c0_130 = arith.constant 0 : index
    %348 = vector.load %arg5[%c0_129, %c0_130] : memref<1x1xf32, #tpu.memory_space<vmem>>, vector<1x1xf32>
    %349 = arith.addf %347, %348 : vector<1x1xf32>
    %cst_131 = arith.constant 5.000000e-01 : f32
    %350 = vector.broadcast %cst_131 : f32 to vector<1x1xf32>
    %351 = arith.mulf %350, %349 : vector<1x1xf32>
    %352 = math.tanh %351 : vector<1x1xf32>
    %cst_132 = arith.constant 1.000000e+00 : f32
    %353 = vector.broadcast %cst_132 : f32 to vector<1x1xf32>
    %354 = arith.addf %352, %353 : vector<1x1xf32>
    %cst_133 = arith.constant 5.000000e-01 : f32
    %355 = vector.broadcast %cst_133 : f32 to vector<1x1xf32>
    %356 = arith.mulf %355, %354 : vector<1x1xf32>
    %c0_134 = arith.constant 0 : index
    %c0_135 = arith.constant 0 : index
    %357 = vector.load %arg6[%c0_134, %c0_135] : memref<1x1xf32, #tpu.memory_space<vmem>>, vector<1x1xf32>
    tpu.vector_store %arg6[%c0_134, %c0_135], %356 {strides = array<i32>} : memref<1x1xf32, #tpu.memory_space<vmem>>, vector<1x1xf32>,
    return
  }
}

</mosaic_0001>

<llo_original>
// kernel: tpu_custom_call.1
$region0: #{tpu_custom_call.1}
  #allocation0 [shape = 'u32[]', space=smem, size = 0x4, offset = 0x4, fixed_abs, tag = 'smem constant byte address 0x4 - core index']
  #allocation1 [shape = 'u32[144,128]{1,0:T(1,128)}', space=vmem, size = 0x12000, scoped, tag = 'internal scratch']
  #allocation2 [shape = 'f32[32,1024]{1,0:T(8,128)}', space=vmem, size = 0x20000, scoped, tag = 'scratch operand']
  #allocation3 [shape = 'f32[1,1]{1,0:T(1,128)S(1)}', space=vmem, size = 0x200, scoped, tag = 'scoped memory for tpu_custom_call.1']
  %s0 = inlined_call_operand.vmem [shape: bf16[32,16], index: 0, kind: input, shape index: {}]
  %s1 = inlined_call_operand.hbm [shape: bf16[16,1024], index: 1, kind: input, shape index: {}]
  %s2 = inlined_call_operand.vmem [shape: f32[1,1024], index: 2, kind: input, shape index: {}]
  %s3 = inlined_call_operand.hbm [shape: bf16[128,1024], index: 3, kind: input, shape index: {}]
  %s4 = inlined_call_operand.vmem [shape: f32[32,128], index: 4, kind: input, shape index: {}]
  %s5 = inlined_call_operand.<no memory space> [shape: f32[1,1], index: 5, kind: input, shape index: {}]
  %s6 = inlined_call_operand.hbm [shape: f32[1,1], index: 6, kind: output, shape index: {}]
  %s7 = sld [smem:[#allocation0]]
  $region42: #{tpu_custom_call.1} parent=0
    _
  %s9 = ssub.s32 1, %s7
  %s10 = scalar_select 0, %s9, %s7
  %v11 = vstv %s5
  %12 = vst [vmem:[#allocation3] sm:$0x1] %v11
  $region1: #{tpu_custom_call.1} parent=0
    #allocation4 [shape = 'u8[32768]{0}', space=vmem, size = 0x8000, scoped, tag = 'input window, operand 1, single buffered']
    #allocation5 [shape = 's32[1]{0}', space=sflag, size = 0x4, scoped, tag = 'scoped memory for tpu_custom_call.1']
    #allocation6 [shape = 's32[1]{0}', space=sflag, size = 0x4, scoped, tag = 'scoped memory for tpu_custom_call.1']
    #allocation7 [shape = 'u8[262144]{0}', space=vmem, size = 0x40000, scoped, tag = 'input window, operand 3, single buffered']
    #allocation8 [shape = 's32[1]{0}', space=sflag, size = 0x4, scoped, tag = 'scoped memory for tpu_custom_call.1']
    #allocation9 [shape = 'u8[512]{0}', space=vmem, size = 0x400, scoped, tag = 'output window, operand 0, single buffered']
    %13 = vsyncpa [#allocation5], 0
    %14 = vsyncpa [#allocation8], 0
    %15 = vsyncpa [#allocation6], 0
    // Predicated region
    $region2: #{tpu_custom_call.1} parent=1 // pred_check
      _
    $region3: #{tpu_custom_call.1} parent=1 // pred_check_branch
      %17 = sbr.rel (0) target = $region5
    $region4: #{tpu_custom_call.1} parent=1 // pred_region
      _
    $region5: #{tpu_custom_call.1} parent=1 // pred_fallthru
      _
    // Predicated region
    $region6: #{tpu_custom_call.1} parent=1 // pred_check
      _
    $region7: #{tpu_custom_call.1} parent=1 // pred_check_branch
      %19 = sbr.rel (0) target = $region9
    $region8: #{tpu_custom_call.1} parent=1 // pred_region
      %s21 = ssub.s32 1024, 1024
      %22 = vsyncadd [#allocation5], %s21
      %s23 = sshll.u32 [#allocation4], 4
      %s24 = int_to_ptr.vmem [resolvable:$true] %s23
      %29 = dma.hbm_to_vmem [thread:$0]  %s1, 1024, %s24, [#allocation5], 512, 512, 32
    $region9: #{tpu_custom_call.1} parent=1 // pred_fallthru
      _
    // Predicated region
    $region10: #{tpu_custom_call.1} parent=1 // pred_check
      _
    $region11: #{tpu_custom_call.1} parent=1 // pred_check_branch
      %31 = sbr.rel (0) target = $region13
    $region12: #{tpu_custom_call.1} parent=1 // pred_region
      _
    $region13: #{tpu_custom_call.1} parent=1 // pred_fallthru
      _
    // Predicated region
    $region14: #{tpu_custom_call.1} parent=1 // pred_check
      _
    $region15: #{tpu_custom_call.1} parent=1 // pred_check_branch
      %33 = sbr.rel (0) target = $region17
    $region16: #{tpu_custom_call.1} parent=1 // pred_region
      %s35 = ssub.s32 8192, 8192
      %36 = vsyncadd [#allocation8], %s35
      %s37 = sshll.u32 [#allocation7], 4
      %s38 = int_to_ptr.vmem [resolvable:$true] %s37
      %43 = dma.hbm_to_vmem [thread:$0]  %s3, 8192, %s38, [#allocation8], 512, 512, 32
    $region17: #{tpu_custom_call.1} parent=1 // pred_fallthru
      _
    // Predicated region
    $region18: #{tpu_custom_call.1} parent=1 // pred_check
      _
    $region19: #{tpu_custom_call.1} parent=1 // pred_check_branch
      %45 = sbr.rel (0) target = $region21
    $region20: #{tpu_custom_call.1} parent=1 // pred_region
      _
    $region21: #{tpu_custom_call.1} parent=1 // pred_fallthru
      _
    // Predicated region
    $region22: #{tpu_custom_call.1} parent=1 // pred_check
      _
    $region23: #{tpu_custom_call.1} parent=1 // pred_check_branch
      %47 = sbr.rel (0) target = $region25
    $region24: #{tpu_custom_call.1} parent=1 // pred_region
      _
    $region25: #{tpu_custom_call.1} parent=1 // pred_fallthru
      _
    // Predicated region
    $region26: #{tpu_custom_call.1} parent=1 // pred_check
      _
    $region27: #{tpu_custom_call.1} parent=1 // pred_check_branch
      %49 = sbr.rel (0) target = $region29
    $region28: #{tpu_custom_call.1} parent=1 // pred_region
      %50 = dma.done [#allocation5], 1024
    $region29: #{tpu_custom_call.1} parent=1 // pred_fallthru
      _
    // Predicated region
    $region30: #{tpu_custom_call.1} parent=1 // pred_check
      _
    $region31: #{tpu_custom_call.1} parent=1 // pred_check_branch
      %52 = sbr.rel (0) target = $region33
    $region32: #{tpu_custom_call.1} parent=1 // pred_region
      %53 = dma.done [#allocation8], 8192
    $region33: #{tpu_custom_call.1} parent=1 // pred_fallthru
      _
    %v55 = vld [vmem:[%s0] sm:$0xf]
    %v56 = vld [vmem:[%s0 + $0x4] sm:$0xf]
    %v57 = vld [vmem:[%s0 + $0x8] sm:$0xf]
    %v58 = vld [vmem:[%s0 + $0xc] sm:$0xf]
    %v59 = vld [vmem:[#allocation4] sm:$0xff]
    %v60 = vld [vmem:[#allocation4 + $0x8] sm:$0xff]
    %v61 = vld [vmem:[#allocation4 + $0x10] sm:$0xff]
    %v62 = vld [vmem:[#allocation4 + $0x18] sm:$0xff]
    %v63 = vld [vmem:[#allocation4 + $0x20] sm:$0xff]
    %v64 = vld [vmem:[#allocation4 + $0x28] sm:$0xff]
    %v65 = vld [vmem:[#allocation4 + $0x30] sm:$0xff]
    %v66 = vld [vmem:[#allocation4 + $0x38] sm:$0xff]
    %v67 = vld [vmem:[%s2] sm:$0xff]
    %v69 = vlaneseq
    %v70 = vshrl.u32 %v69, 7
    %v71 = vsub.s32 0, %v70
    %v72 = vrot.slane %v67, %v71
    %v73 = vlaneseq
    %v74 = vshrl.u32 %v73, 7
    %v75 = vsub.s32 1, %v74
    %v76 = vrot.slane %v67, %v75
    %v77 = vlaneseq
    %v78 = vshrl.u32 %v77, 7
    %v79 = vsub.s32 2, %v78
    %v80 = vrot.slane %v67, %v79
    %v81 = vlaneseq
    %v82 = vshrl.u32 %v81, 7
    %v83 = vsub.s32 3, %v82
    %v84 = vrot.slane %v67, %v83
    %v85 = vlaneseq
    %v86 = vshrl.u32 %v85, 7
    %v87 = vsub.s32 4, %v86
    %v88 = vrot.slane %v67, %v87
    %v89 = vlaneseq
    %v90 = vshrl.u32 %v89, 7
    %v91 = vsub.s32 5, %v90
    %v92 = vrot.slane %v67, %v91
    %v93 = vlaneseq
    %v94 = vshrl.u32 %v93, 7
    %v95 = vsub.s32 6, %v94
    %v96 = vrot.slane %v67, %v95
    %v97 = vlaneseq
    %v98 = vshrl.u32 %v97, 7
    %v99 = vsub.s32 7, %v98
    %v100 = vrot.slane %v67, %v99
    %v113 = vunpack.c.l.b16 %v55
    %v114 = vunpack.c.l.b16 %v56
    %v115 = vunpack.c.l.b16 %v57
    %v116 = vunpack.c.l.b16 %v58
    %v117 = vpack.c.b16 %v114, %v113
    %v118 = vpack.c.b16 %v116, %v115
    %v127 = vunpack.c.l.b16 %v59
    %v128 = vunpack.c.h.b16 %v59
    %v129 = vunpack.c.l.b16 %v60
    %v130 = vunpack.c.h.b16 %v60
    %v131 = vunpack.c.l.b16 %v61
    %v132 = vunpack.c.h.b16 %v61
    %v133 = vunpack.c.l.b16 %v62
    %v134 = vunpack.c.h.b16 %v62
    %v135 = vunpack.c.l.b16 %v63
    %v136 = vunpack.c.h.b16 %v63
    %v137 = vunpack.c.l.b16 %v64
    %v138 = vunpack.c.h.b16 %v64
    %v139 = vunpack.c.l.b16 %v65
    %v140 = vunpack.c.h.b16 %v65
    %v141 = vunpack.c.l.b16 %v66
    %v142 = vunpack.c.h.b16 %v66
    %v143 = vpack.c.b16 %v135, %v127
    %v144 = vpack.c.b16 %v136, %v128
    %v145 = vpack.c.b16 %v137, %v129
    %v146 = vpack.c.b16 %v138, %v130
    %v147 = vpack.c.b16 %v139, %v131
    %v148 = vpack.c.b16 %v140, %v132
    %v149 = vpack.c.b16 %v141, %v133
    %v150 = vpack.c.b16 %v142, %v134
    %vm159 = vcmask 130048
    %v161 = vsel %vm159, %v117, 0
    %v164 = vsel %vm159, %v118, 0
    %166 = vmatprep.subr.bf16.mxu0 %v144
    %167 = vmatpush1.bf16.msra.mxu0 %v143
    %168 = vmatprep.subr.bf16.mxu0 0
    %169 = vmatpush1.bf16.msra.mxu0 0
    %170 = vmatprep.subr.bf16.mxu0 0
    %171 = vmatpush1.bf16.msra.mxu0 0
    %172 = vmatprep.subr.bf16.mxu0 0
    %173 = vmatpush1.bf16.msra.mxu0 0
    %174 = vmatprep.subr.bf16.mxu0 0
    %175 = vmatpush1.bf16.msra.mxu0 0
    %176 = vmatprep.subr.bf16.mxu0 0
    %177 = vmatpush1.bf16.msra.mxu0 0
    %178 = vmatprep.subr.bf16.mxu0 0
    %179 = vmatpush1.bf16.msra.mxu0 0
    %180 = vmatprep.subr.bf16.mxu0 0
    %181 = vmatpush1.bf16.msra.mxu0 0
    %182 = vmatprep.subr.bf16.mxu0 0
    %183 = vmatpush1.bf16.msra.mxu0 0
    %184 = vmatprep.subr.bf16.mxu0 0
    %185 = vmatpush1.bf16.msra.mxu0 0
    %186 = vmatprep.subr.bf16.mxu0 0
    %187 = vmatpush1.bf16.msra.mxu0 0
    %188 = vmatprep.subr.bf16.mxu0 0
    %189 = vmatpush1.bf16.msra.mxu0 0
    %190 = vmatprep.subr.bf16.mxu0 0
    %191 = vmatpush1.bf16.msra.mxu0 0
    %192 = vmatprep.subr.bf16.mxu0 0
    %193 = vmatpush1.bf16.msra.mxu0 0
    %194 = vmatprep.subr.bf16.mxu0 0
    %195 = vmatpush1.bf16.msra.mxu0 0
    %196 = vmatprep.subr.bf16.mxu0 0
    %197 = vmatpush1.bf16.msra.mxu0 0
    %198 = vmatprep.mubr.bf16.mxu0 0
    %199 = vmatmul.mubr.bf16.gmra.mrb[0].mxu0 %v161
    %v200 = vpop.f32.mrb[0].mxu0
    %v201 = vadd.f32 %v72, %v200
    %v202 = vpop.f32.mrb[0].mxu0
    %v203 = vadd.f32 %v76, %v202
    %v204 = vpop.f32.mrb[0].mxu0
    %v205 = vadd.f32 %v72, %v204
    %v206 = vpop.f32.mrb[0].mxu0
    %v207 = vadd.f32 %v76, %v206
    %208 = vmatprep.mubr.bf16.mxu0 0
    %209 = vmatmul.mubr.bf16.gmra.mrb[0].mxu0 %v164
    %v210 = vpop.f32.mrb[0].mxu0
    %v211 = vadd.f32 %v72, %v210
    %v212 = vpop.f32.mrb[0].mxu0
    %v213 = vadd.f32 %v76, %v212
    %v214 = vpop.f32.mrb[0].mxu0
    %v215 = vadd.f32 %v72, %v214
    %v216 = vpop.f32.mrb[0].mxu0
    %v217 = vadd.f32 %v76, %v216
    %218 = vdwg.mxu0
    %219 = vmatprep.subr.bf16.mxu0 %v146
    %220 = vmatpush1.bf16.msra.mxu0 %v145
    %221 = vmatprep.subr.bf16.mxu0 0
    %222 = vmatpush1.bf16.msra.mxu0 0
    %223 = vmatprep.subr.bf16.mxu0 0
    %224 = vmatpush1.bf16.msra.mxu0 0
    %225 = vmatprep.subr.bf16.mxu0 0
    %226 = vmatpush1.bf16.msra.mxu0 0
    %227 = vmatprep.subr.bf16.mxu0 0
    %228 = vmatpush1.bf16.msra.mxu0 0
    %229 = vmatprep.subr.bf16.mxu0 0
    %230 = vmatpush1.bf16.msra.mxu0 0
    %231 = vmatprep.subr.bf16.mxu0 0
    %232 = vmatpush1.bf16.msra.mxu0 0
    %233 = vmatprep.subr.bf16.mxu0 0
    %234 = vmatpush1.bf16.msra.mxu0 0
    %235 = vmatprep.subr.bf16.mxu0 0
    %236 = vmatpush1.bf16.msra.mxu0 0
    %237 = vmatprep.subr.bf16.mxu0 0
    %238 = vmatpush1.bf16.msra.mxu0 0
    %239 = vmatprep.subr.bf16.mxu0 0
    %240 = vmatpush1.bf16.msra.mxu0 0
    %241 = vmatprep.subr.bf16.mxu0 0
    %242 = vmatpush1.bf16.msra.mxu0 0
    %243 = vmatprep.subr.bf16.mxu0 0
    %244 = vmatpush1.bf16.msra.mxu0 0
    %245 = vmatprep.subr.bf16.mxu0 0
    %246 = vmatpush1.bf16.msra.mxu0 0
    %247 = vmatprep.subr.bf16.mxu0 0
    %248 = vmatpush1.bf16.msra.mxu0 0
    %249 = vmatprep.subr.bf16.mxu0 0
    %250 = vmatpush1.bf16.msra.mxu0 0
    %251 = vmatprep.mubr.bf16.mxu0 0
    %252 = vmatmul.mubr.bf16.gmra.mrb[0].mxu0 %v161
    %v253 = vpop.f32.mrb[0].mxu0
    %v254 = vadd.f32 %v80, %v253
    %v255 = vpop.f32.mrb[0].mxu0
    %v256 = vadd.f32 %v84, %v255
    %v257 = vpop.f32.mrb[0].mxu0
    %v258 = vadd.f32 %v80, %v257
    %v259 = vpop.f32.mrb[0].mxu0
    %v260 = vadd.f32 %v84, %v259
    %261 = vmatprep.mubr.bf16.mxu0 0
    %262 = vmatmul.mubr.bf16.gmra.mrb[0].mxu0 %v164
    %v263 = vpop.f32.mrb[0].mxu0
    %v264 = vadd.f32 %v80, %v263
    %v265 = vpop.f32.mrb[0].mxu0
    %v266 = vadd.f32 %v84, %v265
    %v267 = vpop.f32.mrb[0].mxu0
    %v268 = vadd.f32 %v80, %v267
    %v269 = vpop.f32.mrb[0].mxu0
    %v270 = vadd.f32 %v84, %v269
    %271 = vdwg.mxu0
    %272 = vmatprep.subr.bf16.mxu0 %v148
    %273 = vmatpush1.bf16.msra.mxu0 %v147
    %274 = vmatprep.subr.bf16.mxu0 0
    %275 = vmatpush1.bf16.msra.mxu0 0
    %276 = vmatprep.subr.bf16.mxu0 0
    %277 = vmatpush1.bf16.msra.mxu0 0
    %278 = vmatprep.subr.bf16.mxu0 0
    %279 = vmatpush1.bf16.msra.mxu0 0
    %280 = vmatprep.subr.bf16.mxu0 0
    %281 = vmatpush1.bf16.msra.mxu0 0
    %282 = vmatprep.subr.bf16.mxu0 0
    %283 = vmatpush1.bf16.msra.mxu0 0
    %284 = vmatprep.subr.bf16.mxu0 0
    %285 = vmatpush1.bf16.msra.mxu0 0
    %286 = vmatprep.subr.bf16.mxu0 0
    %287 = vmatpush1.bf16.msra.mxu0 0
    %288 = vmatprep.subr.bf16.mxu0 0
    %289 = vmatpush1.bf16.msra.mxu0 0
    %290 = vmatprep.subr.bf16.mxu0 0
    %291 = vmatpush1.bf16.msra.mxu0 0
    %292 = vmatprep.subr.bf16.mxu0 0
    %293 = vmatpush1.bf16.msra.mxu0 0
    %294 = vmatprep.subr.bf16.mxu0 0
    %295 = vmatpush1.bf16.msra.mxu0 0
    %296 = vmatprep.subr.bf16.mxu0 0
    %297 = vmatpush1.bf16.msra.mxu0 0
    %298 = vmatprep.subr.bf16.mxu0 0
    %299 = vmatpush1.bf16.msra.mxu0 0
    %300 = vmatprep.subr.bf16.mxu0 0
    %301 = vmatpush1.bf16.msra.mxu0 0
    %302 = vmatprep.subr.bf16.mxu0 0
    %303 = vmatpush1.bf16.msra.mxu0 0
    %304 = vmatprep.mubr.bf16.mxu0 0
    %305 = vmatmul.mubr.bf16.gmra.mrb[0].mxu0 %v161
    %v306 = vpop.f32.mrb[0].mxu0
    %v307 = vadd.f32 %v88, %v306
    %v308 = vpop.f32.mrb[0].mxu0
    %v309 = vadd.f32 %v92, %v308
    %v310 = vpop.f32.mrb[0].mxu0
    %v311 = vadd.f32 %v88, %v310
    %v312 = vpop.f32.mrb[0].mxu0
    %v313 = vadd.f32 %v92, %v312
    %314 = vmatprep.mubr.bf16.mxu0 0
    %315 = vmatmul.mubr.bf16.gmra.mrb[0].mxu0 %v164
    %v316 = vpop.f32.mrb[0].mxu0
    %v317 = vadd.f32 %v88, %v316
    %v318 = vpop.f32.mrb[0].mxu0
    %v319 = vadd.f32 %v92, %v318
    %v320 = vpop.f32.mrb[0].mxu0
    %v321 = vadd.f32 %v88, %v320
    %v322 = vpop.f32.mrb[0].mxu0
    %v323 = vadd.f32 %v92, %v322
    %324 = vdwg.mxu0
    %325 = vmatprep.subr.bf16.mxu0 %v150
    %326 = vmatpush1.bf16.msra.mxu0 %v149
    %327 = vmatprep.subr.bf16.mxu0 0
    %328 = vmatpush1.bf16.msra.mxu0 0
    %329 = vmatprep.subr.bf16.mxu0 0
    %330 = vmatpush1.bf16.msra.mxu0 0
    %331 = vmatprep.subr.bf16.mxu0 0
    %332 = vmatpush1.bf16.msra.mxu0 0
    %333 = vmatprep.subr.bf16.mxu0 0
    %334 = vmatpush1.bf16.msra.mxu0 0
    %335 = vmatprep.subr.bf16.mxu0 0
    %336 = vmatpush1.bf16.msra.mxu0 0
    %337 = vmatprep.subr.bf16.mxu0 0
    %338 = vmatpush1.bf16.msra.mxu0 0
    %339 = vmatprep.subr.bf16.mxu0 0
    %340 = vmatpush1.bf16.msra.mxu0 0
    %341 = vmatprep.subr.bf16.mxu0 0
    %342 = vmatpush1.bf16.msra.mxu0 0
    %343 = vmatprep.subr.bf16.mxu0 0
    %344 = vmatpush1.bf16.msra.mxu0 0
    %345 = vmatprep.subr.bf16.mxu0 0
    %346 = vmatpush1.bf16.msra.mxu0 0
    %347 = vmatprep.subr.bf16.mxu0 0
    %348 = vmatpush1.bf16.msra.mxu0 0
    %349 = vmatprep.subr.bf16.mxu0 0
    %350 = vmatpush1.bf16.msra.mxu0 0
    %351 = vmatprep.subr.bf16.mxu0 0
    %352 = vmatpush1.bf16.msra.mxu0 0
    %353 = vmatprep.subr.bf16.mxu0 0
    %354 = vmatpush1.bf16.msra.mxu0 0
    %355 = vmatprep.subr.bf16.mxu0 0
    %356 = vmatpush1.bf16.msra.mxu0 0
    %357 = vmatprep.mubr.bf16.mxu0 0
    %358 = vmatmul.mubr.bf16.gmra.mrb[0].mxu0 %v161
    %v359 = vpop.f32.mrb[0].mxu0
    %v360 = vadd.f32 %v96, %v359
    %v361 = vpop.f32.mrb[0].mxu0
    %v362 = vadd.f32 %v100, %v361
    %v363 = vpop.f32.mrb[0].mxu0
    %v364 = vadd.f32 %v96, %v363
    %v365 = vpop.f32.mrb[0].mxu0
    %v366 = vadd.f32 %v100, %v365
    %367 = vmatprep.mubr.bf16.mxu0 0
    %368 = vmatmul.mubr.bf16.gmra.mrb[0].mxu0 %v164
    %v369 = vpop.f32.mrb[0].mxu0
    %v370 = vadd.f32 %v96, %v369
    %v371 = vpop.f32.mrb[0].mxu0
    %v372 = vadd.f32 %v100, %v371
    %v373 = vpop.f32.mrb[0].mxu0
    %v374 = vadd.f32 %v96, %v373
    %v375 = vpop.f32.mrb[0].mxu0
    %v376 = vadd.f32 %v100, %v375
    %377 = vdwg.mxu0
    %378 = vst [vmem:[#allocation2] sm:$0xff] %v201
    %379 = vst [vmem:[#allocation2 + $0x8] sm:$0xff] %v203
    %380 = vst [vmem:[#allocation2 + $0x10] sm:$0xff] %v254
    %381 = vst [vmem:[#allocation2 + $0x18] sm:$0xff] %v256
    %382 = vst [vmem:[#allocation2 + $0x20] sm:$0xff] %v307
    %383 = vst [vmem:[#allocation2 + $0x28] sm:$0xff] %v309
    %384 = vst [vmem:[#allocation2 + $0x30] sm:$0xff] %v360
    %385 = vst [vmem:[#allocation2 + $0x38] sm:$0xff] %v362
    %386 = vst [vmem:[#allocation2 + $0x40] sm:$0xff] %v205
    %387 = vst [vmem:[#allocation2 + $0x48] sm:$0xff] %v207
    %388 = vst [vmem:[#allocation2 + $0x50] sm:$0xff] %v258
    %389 = vst [vmem:[#allocation2 + $0x58] sm:$0xff] %v260
    %390 = vst [vmem:[#allocation2 + $0x60] sm:$0xff] %v311
    %391 = vst [vmem:[#allocation2 + $0x68] sm:$0xff] %v313
    %392 = vst [vmem:[#allocation2 + $0x70] sm:$0xff] %v364
    %393 = vst [vmem:[#allocation2 + $0x78] sm:$0xff] %v366
    %394 = vst [vmem:[#allocation2 + $0x80] sm:$0xff] %v211
    %395 = vst [vmem:[#allocation2 + $0x88] sm:$0xff] %v213
    %396 = vst [vmem:[#allocation2 + $0x90] sm:$0xff] %v264
    %397 = vst [vmem:[#allocation2 + $0x98] sm:$0xff] %v266
    %398 = vst [vmem:[#allocation2 + $0xa0] sm:$0xff] %v317
    %399 = vst [vmem:[#allocation2 + $0xa8] sm:$0xff] %v319
    %400 = vst [vmem:[#allocation2 + $0xb0] sm:$0xff] %v370
    %401 = vst [vmem:[#allocation2 + $0xb8] sm:$0xff] %v372
    %402 = vst [vmem:[#allocation2 + $0xc0] sm:$0xff] %v215
    %403 = vst [vmem:[#allocation2 + $0xc8] sm:$0xff] %v217
    %404 = vst [vmem:[#allocation2 + $0xd0] sm:$0xff] %v268
    %405 = vst [vmem:[#allocation2 + $0xd8] sm:$0xff] %v270
    %406 = vst [vmem:[#allocation2 + $0xe0] sm:$0xff] %v321
    %407 = vst [vmem:[#allocation2 + $0xe8] sm:$0xff] %v323
    %408 = vst [vmem:[#allocation2 + $0xf0] sm:$0xff] %v374
    %409 = vst [vmem:[#allocation2 + $0xf8] sm:$0xff] %v376
    %v410 = vlaneseq
    %v411 = vshrl.u32 %v410, 7
    %vm412 = vcmp.lt.s32.totalorder %v411, 2
    %v413 = vld [vmem:[#allocation2] sm:$0xf]
    %v414 = vld [vmem:[#allocation2 + $0x8] sm:$0xf]
    %v415 = vld [vmem:[#allocation2 + $0x10] sm:$0xf]
    %v416 = vld [vmem:[#allocation2 + $0x18] sm:$0xf]
    %v417 = vld [vmem:[#allocation2 + $0x20] sm:$0xf]
    %v418 = vld [vmem:[#allocation2 + $0x28] sm:$0xf]
    %v419 = vld [vmem:[#allocation2 + $0x30] sm:$0xf]
    %v420 = vld [vmem:[#allocation2 + $0x38] sm:$0xf]
    %v421 = vsel %vm412, %v413, %v417
    %v422 = vsel %vm412, %v414, %v418
    %v423 = vsel %vm412, %v415, %v419
    %v424 = vsel %vm412, %v416, %v420
    %v425 = vmul.f32 %v421, 0.5
    %v426 = vtanh.pop %v425
    %v427 = vadd.f32 %v426, 1.0
    %v428 = vmul.f32 %v427, 0.5
    %v429 = vmul.f32 %v422, 0.5
    %v430 = vtanh.pop %v429
    %v431 = vadd.f32 %v430, 1.0
    %v432 = vmul.f32 %v431, 0.5
    %v433 = vtanh.pop %v423
    %v434 = vmul.f32 %v424, 0.5
    %v435 = vtanh.pop %v434
    %v436 = vadd.f32 %v435, 1.0
    %v437 = vmul.f32 %v436, 0.5
    %v438 = vmul.f32 %v432, 0.0
    %v439 = vmul.f32 %v428, %v433
    %v440 = vadd.f32 %v438, %v439
    %v441 = vtanh.pop %v440
    %v442 = vmul.f32 %v437, %v441
    %v443 = vld [vmem:[%s4] sm:$0xf]
    %v444 = vmul.f32 %v442, %v443
    %v445 = vadd.f32 %v444, 0.0
    %v446 = vpack.c.bf16 %v442, %v442
    %v447 = vld [vmem:[#allocation2] sm:$0xf0]
    %v448 = vld [vmem:[#allocation2 + $0x8] sm:$0xf0]
    %v449 = vld [vmem:[#allocation2 + $0x10] sm:$0xf0]
    %v450 = vld [vmem:[#allocation2 + $0x18] sm:$0xf0]
    %v451 = vld [vmem:[#allocation2 + $0x20] sm:$0xf0]
    %v452 = vld [vmem:[#allocation2 + $0x28] sm:$0xf0]
    %v453 = vld [vmem:[#allocation2 + $0x30] sm:$0xf0]
    %v454 = vld [vmem:[#allocation2 + $0x38] sm:$0xf0]
    %v455 = vld [vmem:[#allocation7] sm:$0xff]
    %v456 = vld [vmem:[#allocation7 + $0x8] sm:$0xff]
    %v457 = vld [vmem:[#allocation7 + $0x10] sm:$0xff]
    %v458 = vld [vmem:[#allocation7 + $0x18] sm:$0xff]
    %v459 = vld [vmem:[#allocation7 + $0x20] sm:$0xff]
    %v460 = vld [vmem:[#allocation7 + $0x28] sm:$0xff]
    %v461 = vld [vmem:[#allocation7 + $0x30] sm:$0xff]
    %v462 = vld [vmem:[#allocation7 + $0x38] sm:$0xff]
    %v463 = vld [vmem:[#allocation7 + $0x40] sm:$0xff]
    %v464 = vld [vmem:[#allocation7 + $0x48] sm:$0xff]
    %v465 = vld [vmem:[#allocation7 + $0x50] sm:$0xff]
    %v466 = vld [vmem:[#allocation7 + $0x58] sm:$0xff]
    %v467 = vld [vmem:[#allocation7 + $0x60] sm:$0xff]
    %v468 = vld [vmem:[#allocation7 + $0x68] sm:$0xff]
    %v469 = vld [vmem:[#allocation7 + $0x70] sm:$0xff]
    %v470 = vld [vmem:[#allocation7 + $0x78] sm:$0xff]
    %v471 = vld [vmem:[#allocation7 + $0x80] sm:$0xff]
    %v472 = vld [vmem:[#allocation7 + $0x88] sm:$0xff]
    %v473 = vld [vmem:[#allocation7 + $0x90] sm:$0xff]
    %v474 = vld [vmem:[#allocation7 + $0x98] sm:$0xff]
    %v475 = vld [vmem:[#allocation7 + $0xa0] sm:$0xff]
    %v476 = vld [vmem:[#allocation7 + $0xa8] sm:$0xff]
    %v477 = vld [vmem:[#allocation7 + $0xb0] sm:$0xff]
    %v478 = vld [vmem:[#allocation7 + $0xb8] sm:$0xff]
    %v479 = vld [vmem:[#allocation7 + $0xc0] sm:$0xff]
    %v480 = vld [vmem:[#allocation7 + $0xc8] sm:$0xff]
    %v481 = vld [vmem:[#allocation7 + $0xd0] sm:$0xff]
    %v482 = vld [vmem:[#allocation7 + $0xd8] sm:$0xff]
    %v483 = vld [vmem:[#allocation7 + $0xe0] sm:$0xff]
    %v484 = vld [vmem:[#allocation7 + $0xe8] sm:$0xff]
    %v485 = vld [vmem:[#allocation7 + $0xf0] sm:$0xff]
    %v486 = vld [vmem:[#allocation7 + $0xf8] sm:$0xff]
    %v487 = vld [vmem:[#allocation7 + $0x100] sm:$0xff]
    %v488 = vld [vmem:[#allocation7 + $0x108] sm:$0xff]
    %v489 = vld [vmem:[#allocation7 + $0x110] sm:$0xff]
    %v490 = vld [vmem:[#allocation7 + $0x118] sm:$0xff]
    %v491 = vld [vmem:[#allocation7 + $0x120] sm:$0xff]
    %v492 = vld [vmem:[#allocation7 + $0x128] sm:$0xff]
    %v493 = vld [vmem:[#allocation7 + $0x130] sm:$0xff]
    %v494 = vld [vmem:[#allocation7 + $0x138] sm:$0xff]
    %v495 = vld [vmem:[#allocation7 + $0x140] sm:$0xff]
    %v496 = vld [vmem:[#allocation7 + $0x148] sm:$0xff]
    %v497 = vld [vmem:[#allocation7 + $0x150] sm:$0xff]
    %v498 = vld [vmem:[#allocation7 + $0x158] sm:$0xff]
    %v499 = vld [vmem:[#allocation7 + $0x160] sm:$0xff]
    %v500 = vld [vmem:[#allocation7 + $0x168] sm:$0xff]
    %v501 = vld [vmem:[#allocation7 + $0x170] sm:$0xff]
    %v502 = vld [vmem:[#allocation7 + $0x178] sm:$0xff]
    %v503 = vld [vmem:[#allocation7 + $0x180] sm:$0xff]
    %v504 = vld [vmem:[#allocation7 + $0x188] sm:$0xff]
    %v505 = vld [vmem:[#allocation7 + $0x190] sm:$0xff]
    %v506 = vld [vmem:[#allocation7 + $0x198] sm:$0xff]
    %v507 = vld [vmem:[#allocation7 + $0x1a0] sm:$0xff]
    %v508 = vld [vmem:[#allocation7 + $0x1a8] sm:$0xff]
    %v509 = vld [vmem:[#allocation7 + $0x1b0] sm:$0xff]
    %v510 = vld [vmem:[#allocation7 + $0x1b8] sm:$0xff]
    %v511 = vld [vmem:[#allocation7 + $0x1c0] sm:$0xff]
    %v512 = vld [vmem:[#allocation7 + $0x1c8] sm:$0xff]
    %v513 = vld [vmem:[#allocation7 + $0x1d0] sm:$0xff]
    %v514 = vld [vmem:[#allocation7 + $0x1d8] sm:$0xff]
    %v515 = vld [vmem:[#allocation7 + $0x1e0] sm:$0xff]
    %v516 = vld [vmem:[#allocation7 + $0x1e8] sm:$0xff]
    %v517 = vld [vmem:[#allocation7 + $0x1f0] sm:$0xff]
    %v518 = vld [vmem:[#allocation7 + $0x1f8] sm:$0xff]
    %v583 = vunpack.c.l.b16 %v455
    %v584 = vunpack.c.h.b16 %v455
    %v585 = vunpack.c.l.b16 %v456
    %v586 = vunpack.c.h.b16 %v456
    %v587 = vunpack.c.l.b16 %v457
    %v588 = vunpack.c.h.b16 %v457
    %v589 = vunpack.c.l.b16 %v458
    %v590 = vunpack.c.h.b16 %v458
    %v591 = vunpack.c.l.b16 %v459
    %v592 = vunpack.c.h.b16 %v459
    %v593 = vunpack.c.l.b16 %v460
    %v594 = vunpack.c.h.b16 %v460
    %v595 = vunpack.c.l.b16 %v461
    %v596 = vunpack.c.h.b16 %v461
    %v597 = vunpack.c.l.b16 %v462
    %v598 = vunpack.c.h.b16 %v462
    %v599 = vunpack.c.l.b16 %v463
    %v600 = vunpack.c.h.b16 %v463
    %v601 = vunpack.c.l.b16 %v464
    %v602 = vunpack.c.h.b16 %v464
    %v603 = vunpack.c.l.b16 %v465
    %v604 = vunpack.c.h.b16 %v465
    %v605 = vunpack.c.l.b16 %v466
    %v606 = vunpack.c.h.b16 %v466
    %v607 = vunpack.c.l.b16 %v467
    %v608 = vunpack.c.h.b16 %v467
    %v609 = vunpack.c.l.b16 %v468
    %v610 = vunpack.c.h.b16 %v468
    %v611 = vunpack.c.l.b16 %v469
    %v612 = vunpack.c.h.b16 %v469
    %v613 = vunpack.c.l.b16 %v470
    %v614 = vunpack.c.h.b16 %v470
    %v615 = vunpack.c.l.b16 %v471
    %v616 = vunpack.c.h.b16 %v471
    %v617 = vunpack.c.l.b16 %v472
    %v618 = vunpack.c.h.b16 %v472
    %v619 = vunpack.c.l.b16 %v473
    %v620 = vunpack.c.h.b16 %v473
    %v621 = vunpack.c.l.b16 %v474
    %v622 = vunpack.c.h.b16 %v474
    %v623 = vunpack.c.l.b16 %v475
    %v624 = vunpack.c.h.b16 %v475
    %v625 = vunpack.c.l.b16 %v476
    %v626 = vunpack.c.h.b16 %v476
    %v627 = vunpack.c.l.b16 %v477
    %v628 = vunpack.c.h.b16 %v477
    %v629 = vunpack.c.l.b16 %v478
    %v630 = vunpack.c.h.b16 %v478
    %v631 = vunpack.c.l.b16 %v479
    %v632 = vunpack.c.h.b16 %v479
    %v633 = vunpack.c.l.b16 %v480
    %v634 = vunpack.c.h.b16 %v480
    %v635 = vunpack.c.l.b16 %v481
    %v636 = vunpack.c.h.b16 %v481
    %v637 = vunpack.c.l.b16 %v482
    %v638 = vunpack.c.h.b16 %v482
    %v639 = vunpack.c.l.b16 %v483
    %v640 = vunpack.c.h.b16 %v483
    %v641 = vunpack.c.l.b16 %v484
    %v642 = vunpack.c.h.b16 %v484
    %v643 = vunpack.c.l.b16 %v485
    %v644 = vunpack.c.h.b16 %v485
    %v645 = vunpack.c.l.b16 %v486
    %v646 = vunpack.c.h.b16 %v486
    %v647 = vunpack.c.l.b16 %v487
    %v648 = vunpack.c.h.b16 %v487
    %v649 = vunpack.c.l.b16 %v488
    %v650 = vunpack.c.h.b16 %v488
    %v651 = vunpack.c.l.b16 %v489
    %v652 = vunpack.c.h.b16 %v489
    %v653 = vunpack.c.l.b16 %v490
    %v654 = vunpack.c.h.b16 %v490
    %v655 = vunpack.c.l.b16 %v491
    %v656 = vunpack.c.h.b16 %v491
    %v657 = vunpack.c.l.b16 %v492
    %v658 = vunpack.c.h.b16 %v492
    %v659 = vunpack.c.l.b16 %v493
    %v660 = vunpack.c.h.b16 %v493
    %v661 = vunpack.c.l.b16 %v494
    %v662 = vunpack.c.h.b16 %v494
    %v663 = vunpack.c.l.b16 %v495
    %v664 = vunpack.c.h.b16 %v495
    %v665 = vunpack.c.l.b16 %v496
    %v666 = vunpack.c.h.b16 %v496
    %v667 = vunpack.c.l.b16 %v497
    %v668 = vunpack.c.h.b16 %v497
    %v669 = vunpack.c.l.b16 %v498
    %v670 = vunpack.c.h.b16 %v498
    %v671 = vunpack.c.l.b16 %v499
    %v672 = vunpack.c.h.b16 %v499
    %v673 = vunpack.c.l.b16 %v500
    %v674 = vunpack.c.h.b16 %v500
    %v675 = vunpack.c.l.b16 %v501
    %v676 = vunpack.c.h.b16 %v501
    %v677 = vunpack.c.l.b16 %v502
    %v678 = vunpack.c.h.b16 %v502
    %v679 = vunpack.c.l.b16 %v503
    %v680 = vunpack.c.h.b16 %v503
    %v681 = vunpack.c.l.b16 %v504
    %v682 = vunpack.c.h.b16 %v504
    %v683 = vunpack.c.l.b16 %v505
    %v684 = vunpack.c.h.b16 %v505
    %v685 = vunpack.c.l.b16 %v506
    %v686 = vunpack.c.h.b16 %v506
    %v687 = vunpack.c.l.b16 %v507
    %v688 = vunpack.c.h.b16 %v507
    %v689 = vunpack.c.l.b16 %v508
    %v690 = vunpack.c.h.b16 %v508
    %v691 = vunpack.c.l.b16 %v509
    %v692 = vunpack.c.h.b16 %v509
    %v693 = vunpack.c.l.b16 %v510
    %v694 = vunpack.c.h.b16 %v510
    %v695 = vunpack.c.l.b16 %v511
    %v696 = vunpack.c.h.b16 %v511
    %v697 = vunpack.c.l.b16 %v512
    %v698 = vunpack.c.h.b16 %v512
    %v699 = vunpack.c.l.b16 %v513
    %v700 = vunpack.c.h.b16 %v513
    %v701 = vunpack.c.l.b16 %v514
    %v702 = vunpack.c.h.b16 %v514
    %v703 = vunpack.c.l.b16 %v515
    %v704 = vunpack.c.h.b16 %v515
    %v705 = vunpack.c.l.b16 %v516
    %v706 = vunpack.c.h.b16 %v516
    %v707 = vunpack.c.l.b16 %v517
    %v708 = vunpack.c.h.b16 %v517
    %v709 = vunpack.c.l.b16 %v518
    %v710 = vunpack.c.h.b16 %v518
    %v711 = vpack.c.b16 %v591, %v583
    %v712 = vpack.c.b16 %v592, %v584
    %v713 = vpack.c.b16 %v593, %v585
    %v714 = vpack.c.b16 %v594, %v586
    %v715 = vpack.c.b16 %v595, %v587
    %v716 = vpack.c.b16 %v596, %v588
    %v717 = vpack.c.b16 %v597, %v589
    %v718 = vpack.c.b16 %v598, %v590
    %v719 = vpack.c.b16 %v607, %v599
    %v720 = vpack.c.b16 %v608, %v600
    %v721 = vpack.c.b16 %v609, %v601
    %v722 = vpack.c.b16 %v610, %v602
    %v723 = vpack.c.b16 %v611, %v603
    %v724 = vpack.c.b16 %v612, %v604
    %v725 = vpack.c.b16 %v613, %v605
    %v726 = vpack.c.b16 %v614, %v606
    %v727 = vpack.c.b16 %v623, %v615
    %v728 = vpack.c.b16 %v624, %v616
    %v729 = vpack.c.b16 %v625, %v617
    %v730 = vpack.c.b16 %v626, %v618
    %v731 = vpack.c.b16 %v627, %v619
    %v732 = vpack.c.b16 %v628, %v620
    %v733 = vpack.c.b16 %v629, %v621
    %v734 = vpack.c.b16 %v630, %v622
    %v735 = vpack.c.b16 %v639, %v631
    %v736 = vpack.c.b16 %v640, %v632
    %v737 = vpack.c.b16 %v641, %v633
    %v738 = vpack.c.b16 %v642, %v634
    %v739 = vpack.c.b16 %v643, %v635
    %v740 = vpack.c.b16 %v644, %v636
    %v741 = vpack.c.b16 %v645, %v637
    %v742 = vpack.c.b16 %v646, %v638
    %v743 = vpack.c.b16 %v655, %v647
    %v744 = vpack.c.b16 %v656, %v648
    %v745 = vpack.c.b16 %v657, %v649
    %v746 = vpack.c.b16 %v658, %v650
    %v747 = vpack.c.b16 %v659, %v651
    %v748 = vpack.c.b16 %v660, %v652
    %v749 = vpack.c.b16 %v661, %v653
    %v750 = vpack.c.b16 %v662, %v654
    %v751 = vpack.c.b16 %v671, %v663
    %v752 = vpack.c.b16 %v672, %v664
    %v753 = vpack.c.b16 %v673, %v665
    %v754 = vpack.c.b16 %v674, %v666
    %v755 = vpack.c.b16 %v675, %v667
    %v756 = vpack.c.b16 %v676, %v668
    %v757 = vpack.c.b16 %v677, %v669
    %v758 = vpack.c.b16 %v678, %v670
    %v759 = vpack.c.b16 %v687, %v679
    %v760 = vpack.c.b16 %v688, %v680
    %v761 = vpack.c.b16 %v689, %v681
    %v762 = vpack.c.b16 %v690, %v682
    %v763 = vpack.c.b16 %v691, %v683
    %v764 = vpack.c.b16 %v692, %v684
    %v765 = vpack.c.b16 %v693, %v685
    %v766 = vpack.c.b16 %v694, %v686
    %v767 = vpack.c.b16 %v703, %v695
    %v768 = vpack.c.b16 %v704, %v696
    %v769 = vpack.c.b16 %v705, %v697
    %v770 = vpack.c.b16 %v706, %v698
    %v771 = vpack.c.b16 %v707, %v699
    %v772 = vpack.c.b16 %v708, %v700
    %v773 = vpack.c.b16 %v709, %v701
    %v774 = vpack.c.b16 %v710, %v702
    %839 = vmatprep.subr.bf16.mxu0 %v712
    %840 = vmatpush1.bf16.msra.mxu0 %v711
    %841 = vmatprep.subr.bf16.mxu0 %v720
    %842 = vmatpush1.bf16.msra.mxu0 %v719
    %843 = vmatprep.subr.bf16.mxu0 %v728
    %844 = vmatpush1.bf16.msra.mxu0 %v727
    %845 = vmatprep.subr.bf16.mxu0 %v736
    %846 = vmatpush1.bf16.msra.mxu0 %v735
    %847 = vmatprep.subr.bf16.mxu0 %v744
    %848 = vmatpush1.bf16.msra.mxu0 %v743
    %849 = vmatprep.subr.bf16.mxu0 %v752
    %850 = vmatpush1.bf16.msra.mxu0 %v751
    %851 = vmatprep.subr.bf16.mxu0 %v760
    %852 = vmatpush1.bf16.msra.mxu0 %v759
    %853 = vmatprep.subr.bf16.mxu0 %v768
    %854 = vmatpush1.bf16.msra.mxu0 %v767
    %855 = vmatprep.subr.bf16.mxu0 0
    %856 = vmatpush1.bf16.msra.mxu0 0
    %857 = vmatprep.subr.bf16.mxu0 0
    %858 = vmatpush1.bf16.msra.mxu0 0
    %859 = vmatprep.subr.bf16.mxu0 0
    %860 = vmatpush1.bf16.msra.mxu0 0
    %861 = vmatprep.subr.bf16.mxu0 0
    %862 = vmatpush1.bf16.msra.mxu0 0
    %863 = vmatprep.subr.bf16.mxu0 0
    %864 = vmatpush1.bf16.msra.mxu0 0
    %865 = vmatprep.subr.bf16.mxu0 0
    %866 = vmatpush1.bf16.msra.mxu0 0
    %867 = vmatprep.subr.bf16.mxu0 0
    %868 = vmatpush1.bf16.msra.mxu0 0
    %869 = vmatprep.subr.bf16.mxu0 0
    %870 = vmatpush1.bf16.msra.mxu0 0
    %871 = vmatprep.mubr.bf16.mxu0 0
    %872 = vmatmul.mubr.bf16.gmra.mrb[0].mxu0 %v446
    %v873 = vpop.f32.mrb[0].mxu0
    %v874 = vadd.f32 0.0, %v873
    %v875 = vpop.f32.mrb[0].mxu0
    %v876 = vadd.f32 0.0, %v875
    %v877 = vpop.f32.mrb[0].mxu0
    %v878 = vpop.f32.mrb[0].mxu0
    %879 = vdwg.mxu0
    %880 = vmatprep.subr.bf16.mxu0 %v714
    %881 = vmatpush1.bf16.msra.mxu0 %v713
    %882 = vmatprep.subr.bf16.mxu0 %v722
    %883 = vmatpush1.bf16.msra.mxu0 %v721
    %884 = vmatprep.subr.bf16.mxu0 %v730
    %885 = vmatpush1.bf16.msra.mxu0 %v729
    %886 = vmatprep.subr.bf16.mxu0 %v738
    %887 = vmatpush1.bf16.msra.mxu0 %v737
    %888 = vmatprep.subr.bf16.mxu0 %v746
    %889 = vmatpush1.bf16.msra.mxu0 %v745
    %890 = vmatprep.subr.bf16.mxu0 %v754
    %891 = vmatpush1.bf16.msra.mxu0 %v753
    %892 = vmatprep.subr.bf16.mxu0 %v762
    %893 = vmatpush1.bf16.msra.mxu0 %v761
    %894 = vmatprep.subr.bf16.mxu0 %v770
    %895 = vmatpush1.bf16.msra.mxu0 %v769
    %896 = vmatprep.subr.bf16.mxu0 0
    %897 = vmatpush1.bf16.msra.mxu0 0
    %898 = vmatprep.subr.bf16.mxu0 0
    %899 = vmatpush1.bf16.msra.mxu0 0
    %900 = vmatprep.subr.bf16.mxu0 0
    %901 = vmatpush1.bf16.msra.mxu0 0
    %902 = vmatprep.subr.bf16.mxu0 0
    %903 = vmatpush1.bf16.msra.mxu0 0
    %904 = vmatprep.subr.bf16.mxu0 0
    %905 = vmatpush1.bf16.msra.mxu0 0
    %906 = vmatprep.subr.bf16.mxu0 0
    %907 = vmatpush1.bf16.msra.mxu0 0
    %908 = vmatprep.subr.bf16.mxu0 0
    %909 = vmatpush1.bf16.msra.mxu0 0
    %910 = vmatprep.subr.bf16.mxu0 0
    %911 = vmatpush1.bf16.msra.mxu0 0
    %912 = vmatprep.mubr.bf16.mxu0 0
    %913 = vmatmul.mubr.bf16.gmra.mrb[0].mxu0 %v446
    %v914 = vpop.f32.mrb[0].mxu0
    %v915 = vadd.f32 0.0, %v914
    %v916 = vpop.f32.mrb[0].mxu0
    %v917 = vadd.f32 0.0, %v916
    %v918 = vpop.f32.mrb[0].mxu0
    %v919 = vpop.f32.mrb[0].mxu0
    %920 = vdwg.mxu0
    %921 = vmatprep.subr.bf16.mxu0 %v716
    %922 = vmatpush1.bf16.msra.mxu0 %v715
    %923 = vmatprep.subr.bf16.mxu0 %v724
    %924 = vmatpush1.bf16.msra.mxu0 %v723
    %925 = vmatprep.subr.bf16.mxu0 %v732
    %926 = vmatpush1.bf16.msra.mxu0 %v731
    %927 = vmatprep.subr.bf16.mxu0 %v740
    %928 = vmatpush1.bf16.msra.mxu0 %v739
    %929 = vmatprep.subr.bf16.mxu0 %v748
    %930 = vmatpush1.bf16.msra.mxu0 %v747
    %931 = vmatprep.subr.bf16.mxu0 %v756
    %932 = vmatpush1.bf16.msra.mxu0 %v755
    %933 = vmatprep.subr.bf16.mxu0 %v764
    %934 = vmatpush1.bf16.msra.mxu0 %v763
    %935 = vmatprep.subr.bf16.mxu0 %v772
    %936 = vmatpush1.bf16.msra.mxu0 %v771
    %937 = vmatprep.subr.bf16.mxu0 0
    %938 = vmatpush1.bf16.msra.mxu0 0
    %939 = vmatprep.subr.bf16.mxu0 0
    %940 = vmatpush1.bf16.msra.mxu0 0
    %941 = vmatprep.subr.bf16.mxu0 0
    %942 = vmatpush1.bf16.msra.mxu0 0
    %943 = vmatprep.subr.bf16.mxu0 0
    %944 = vmatpush1.bf16.msra.mxu0 0
    %945 = vmatprep.subr.bf16.mxu0 0
    %946 = vmatpush1.bf16.msra.mxu0 0
    %947 = vmatprep.subr.bf16.mxu0 0
    %948 = vmatpush1.bf16.msra.mxu0 0
    %949 = vmatprep.subr.bf16.mxu0 0
    %950 = vmatpush1.bf16.msra.mxu0 0
    %951 = vmatprep.subr.bf16.mxu0 0
    %952 = vmatpush1.bf16.msra.mxu0 0
    %953 = vmatprep.mubr.bf16.mxu0 0
    %954 = vmatmul.mubr.bf16.gmra.mrb[0].mxu0 %v446
    %v955 = vpop.f32.mrb[0].mxu0
    %v956 = vadd.f32 0.0, %v955
    %v957 = vpop.f32.mrb[0].mxu0
    %v958 = vadd.f32 0.0, %v957
    %v959 = vpop.f32.mrb[0].mxu0
    %v960 = vpop.f32.mrb[0].mxu0
    %961 = vdwg.mxu0
    %962 = vmatprep.subr.bf16.mxu0 %v718
    %963 = vmatpush1.bf16.msra.mxu0 %v717
    %964 = vmatprep.subr.bf16.mxu0 %v726
    %965 = vmatpush1.bf16.msra.mxu0 %v725
    %966 = vmatprep.subr.bf16.mxu0 %v734
    %967 = vmatpush1.bf16.msra.mxu0 %v733
    %968 = vmatprep.subr.bf16.mxu0 %v742
    %969 = vmatpush1.bf16.msra.mxu0 %v741
    %970 = vmatprep.subr.bf16.mxu0 %v750
    %971 = vmatpush1.bf16.msra.mxu0 %v749
    %972 = vmatprep.subr.bf16.mxu0 %v758
    %973 = vmatpush1.bf16.msra.mxu0 %v757
    %974 = vmatprep.subr.bf16.mxu0 %v766
    %975 = vmatpush1.bf16.msra.mxu0 %v765
    %976 = vmatprep.subr.bf16.mxu0 %v774
    %977 = vmatpush1.bf16.msra.mxu0 %v773
    %978 = vmatprep.subr.bf16.mxu0 0
    %979 = vmatpush1.bf16.msra.mxu0 0
    %980 = vmatprep.subr.bf16.mxu0 0
    %981 = vmatpush1.bf16.msra.mxu0 0
    %982 = vmatprep.subr.bf16.mxu0 0
    %983 = vmatpush1.bf16.msra.mxu0 0
    %984 = vmatprep.subr.bf16.mxu0 0
    %985 = vmatpush1.bf16.msra.mxu0 0
    %986 = vmatprep.subr.bf16.mxu0 0
    %987 = vmatpush1.bf16.msra.mxu0 0
    %988 = vmatprep.subr.bf16.mxu0 0
    %989 = vmatpush1.bf16.msra.mxu0 0
    %990 = vmatprep.subr.bf16.mxu0 0
    %991 = vmatpush1.bf16.msra.mxu0 0
    %992 = vmatprep.subr.bf16.mxu0 0
    %993 = vmatpush1.bf16.msra.mxu0 0
    %994 = vmatprep.mubr.bf16.mxu0 0
    %995 = vmatmul.mubr.bf16.gmra.mrb[0].mxu0 %v446
    %v996 = vpop.f32.mrb[0].mxu0
    %v997 = vadd.f32 0.0, %v996
    %v998 = vpop.f32.mrb[0].mxu0
    %v999 = vadd.f32 0.0, %v998
    %v1000 = vpop.f32.mrb[0].mxu0
    %v1001 = vpop.f32.mrb[0].mxu0
    %1002 = vdwg.mxu0
    %v1011 = vrot.slane %v874, 4
    %v1012 = vrot.slane %v876, 4
    %v1013 = vrot.slane %v915, 4
    %v1014 = vrot.slane %v917, 4
    %v1015 = vrot.slane %v956, 4
    %v1016 = vrot.slane %v958, 4
    %v1017 = vrot.slane %v997, 4
    %v1018 = vrot.slane %v999, 4
    %v1027 = vadd.f32 %v447, %v1011
    %v1028 = vadd.f32 %v448, %v1012
    %v1029 = vadd.f32 %v449, %v1013
    %v1030 = vadd.f32 %v450, %v1014
    %v1031 = vadd.f32 %v451, %v1015
    %v1032 = vadd.f32 %v452, %v1016
    %v1033 = vadd.f32 %v453, %v1017
    %v1034 = vadd.f32 %v454, %v1018
    %v1039 = vrot.slane %v1027, 4
    %v1040 = vrot.slane %v1028, 4
    %v1041 = vrot.slane %v1029, 4
    %v1042 = vrot.slane %v1030, 4
    %v1051 = vrot.slane %v1031, 4
    %v1052 = vrot.slane %v1032, 4
    %v1053 = vrot.slane %v1033, 4
    %v1054 = vrot.slane %v1034, 4
    %v1059 = vsel %vm412, %v1039, %v1051
    %v1060 = vsel %vm412, %v1040, %v1052
    %v1061 = vsel %vm412, %v1041, %v1053
    %v1062 = vsel %vm412, %v1042, %v1054
    %v1063 = vmul.f32 %v1059, 0.5
    %v1064 = vtanh.pop %v1063
    %v1065 = vadd.f32 %v1064, 1.0
    %v1066 = vmul.f32 %v1065, 0.5
    %v1067 = vmul.f32 %v1060, 0.5
    %v1068 = vtanh.pop %v1067
    %v1069 = vadd.f32 %v1068, 1.0
    %v1070 = vmul.f32 %v1069, 0.5
    %v1071 = vtanh.pop %v1061
    %v1072 = vmul.f32 %v1062, 0.5
    %v1073 = vtanh.pop %v1072
    %v1074 = vadd.f32 %v1073, 1.0
    %v1075 = vmul.f32 %v1074, 0.5
    %v1076 = vmul.f32 %v1070, %v440
    %v1077 = vmul.f32 %v1066, %v1071
    %v1078 = vadd.f32 %v1076, %v1077
    %v1079 = vtanh.pop %v1078
    %v1080 = vmul.f32 %v1075, %v1079
    %v1081 = vld [vmem:[%s4 + $0x4] sm:$0xf]
    %v1082 = vmul.f32 %v1080, %v1081
    %v1083 = vadd.f32 %v445, %v1082
    %v1084 = vpack.c.bf16 %v1080, %v1080
    %v1085 = vld [vmem:[#allocation2 + $0x40] sm:$0xf]
    %v1086 = vld [vmem:[#allocation2 + $0x48] sm:$0xf]
    %v1087 = vld [vmem:[#allocation2 + $0x50] sm:$0xf]
    %v1088 = vld [vmem:[#allocation2 + $0x58] sm:$0xf]
    %v1089 = vld [vmem:[#allocation2 + $0x60] sm:$0xf]
    %v1090 = vld [vmem:[#allocation2 + $0x68] sm:$0xf]
    %v1091 = vld [vmem:[#allocation2 + $0x70] sm:$0xf]
    %v1092 = vld [vmem:[#allocation2 + $0x78] sm:$0xf]
    %1093 = vmatprep.subr.bf16.mxu0 %v712
    %1094 = vmatpush1.bf16.msra.mxu0 %v711
    %1095 = vmatprep.subr.bf16.mxu0 %v720
    %1096 = vmatpush1.bf16.msra.mxu0 %v719
    %1097 = vmatprep.subr.bf16.mxu0 %v728
    %1098 = vmatpush1.bf16.msra.mxu0 %v727
    %1099 = vmatprep.subr.bf16.mxu0 %v736
    %1100 = vmatpush1.bf16.msra.mxu0 %v735
    %1101 = vmatprep.subr.bf16.mxu0 %v744
    %1102 = vmatpush1.bf16.msra.mxu0 %v743
    %1103 = vmatprep.subr.bf16.mxu0 %v752
    %1104 = vmatpush1.bf16.msra.mxu0 %v751
    %1105 = vmatprep.subr.bf16.mxu0 %v760
    %1106 = vmatpush1.bf16.msra.mxu0 %v759
    %1107 = vmatprep.subr.bf16.mxu0 %v768
    %1108 = vmatpush1.bf16.msra.mxu0 %v767
    %1109 = vmatprep.subr.bf16.mxu0 0
    %1110 = vmatpush1.bf16.msra.mxu0 0
    %1111 = vmatprep.subr.bf16.mxu0 0
    %1112 = vmatpush1.bf16.msra.mxu0 0
    %1113 = vmatprep.subr.bf16.mxu0 0
    %1114 = vmatpush1.bf16.msra.mxu0 0
    %1115 = vmatprep.subr.bf16.mxu0 0
    %1116 = vmatpush1.bf16.msra.mxu0 0
    %1117 = vmatprep.subr.bf16.mxu0 0
    %1118 = vmatpush1.bf16.msra.mxu0 0
    %1119 = vmatprep.subr.bf16.mxu0 0
    %1120 = vmatpush1.bf16.msra.mxu0 0
    %1121 = vmatprep.subr.bf16.mxu0 0
    %1122 = vmatpush1.bf16.msra.mxu0 0
    %1123 = vmatprep.subr.bf16.mxu0 0
    %1124 = vmatpush1.bf16.msra.mxu0 0
    %1125 = vmatprep.mubr.bf16.mxu0 0
    %1126 = vmatmul.mubr.bf16.gmra.mrb[0].mxu0 %v1084
    %v1127 = vpop.f32.mrb[0].mxu0
    %v1128 = vadd.f32 0.0, %v1127
    %v1129 = vpop.f32.mrb[0].mxu0
    %v1130 = vadd.f32 0.0, %v1129
    %v1131 = vpop.f32.mrb[0].mxu0
    %v1132 = vpop.f32.mrb[0].mxu0
    %1133 = vdwg.mxu0
    %1134 = vmatprep.subr.bf16.mxu0 %v714
    %1135 = vmatpush1.bf16.msra.mxu0 %v713
    %1136 = vmatprep.subr.bf16.mxu0 %v722
    %1137 = vmatpush1.bf16.msra.mxu0 %v721
    %1138 = vmatprep.subr.bf16.mxu0 %v730
    %1139 = vmatpush1.bf16.msra.mxu0 %v729
    %1140 = vmatprep.subr.bf16.mxu0 %v738
    %1141 = vmatpush1.bf16.msra.mxu0 %v737
    %1142 = vmatprep.subr.bf16.mxu0 %v746
    %1143 = vmatpush1.bf16.msra.mxu0 %v745
    %1144 = vmatprep.subr.bf16.mxu0 %v754
    %1145 = vmatpush1.bf16.msra.mxu0 %v753
    %1146 = vmatprep.subr.bf16.mxu0 %v762
    %1147 = vmatpush1.bf16.msra.mxu0 %v761
    %1148 = vmatprep.subr.bf16.mxu0 %v770
    %1149 = vmatpush1.bf16.msra.mxu0 %v769
    %1150 = vmatprep.subr.bf16.mxu0 0
    %1151 = vmatpush1.bf16.msra.mxu0 0
    %1152 = vmatprep.subr.bf16.mxu0 0
    %1153 = vmatpush1.bf16.msra.mxu0 0
    %1154 = vmatprep.subr.bf16.mxu0 0
    %1155 = vmatpush1.bf16.msra.mxu0 0
    %1156 = vmatprep.subr.bf16.mxu0 0
    %1157 = vmatpush1.bf16.msra.mxu0 0
    %1158 = vmatprep.subr.bf16.mxu0 0
    %1159 = vmatpush1.bf16.msra.mxu0 0
    %1160 = vmatprep.subr.bf16.mxu0 0
    %1161 = vmatpush1.bf16.msra.mxu0 0
    %1162 = vmatprep.subr.bf16.mxu0 0
    %1163 = vmatpush1.bf16.msra.mxu0 0
    %1164 = vmatprep.subr.bf16.mxu0 0
    %1165 = vmatpush1.bf16.msra.mxu0 0
    %1166 = vmatprep.mubr.bf16.mxu0 0
    %1167 = vmatmul.mubr.bf16.gmra.mrb[0].mxu0 %v1084
    %v1168 = vpop.f32.mrb[0].mxu0
    %v1169 = vadd.f32 0.0, %v1168
    %v1170 = vpop.f32.mrb[0].mxu0
    %v1171 = vadd.f32 0.0, %v1170
    %v1172 = vpop.f32.mrb[0].mxu0
    %v1173 = vpop.f32.mrb[0].mxu0
    %1174 = vdwg.mxu0
    %1175 = vmatprep.subr.bf16.mxu0 %v716
    %1176 = vmatpush1.bf16.msra.mxu0 %v715
    %1177 = vmatprep.subr.bf16.mxu0 %v724
    %1178 = vmatpush1.bf16.msra.mxu0 %v723
    %1179 = vmatprep.subr.bf16.mxu0 %v732
    %1180 = vmatpush1.bf16.msra.mxu0 %v731
    %1181 = vmatprep.subr.bf16.mxu0 %v740
    %1182 = vmatpush1.bf16.msra.mxu0 %v739
    %1183 = vmatprep.subr.bf16.mxu0 %v748
    %1184 = vmatpush1.bf16.msra.mxu0 %v747
    %1185 = vmatprep.subr.bf16.mxu0 %v756
    %1186 = vmatpush1.bf16.msra.mxu0 %v755
    %1187 = vmatprep.subr.bf16.mxu0 %v764
    %1188 = vmatpush1.bf16.msra.mxu0 %v763
    %1189 = vmatprep.subr.bf16.mxu0 %v772
    %1190 = vmatpush1.bf16.msra.mxu0 %v771
    %1191 = vmatprep.subr.bf16.mxu0 0
    %1192 = vmatpush1.bf16.msra.mxu0 0
    %1193 = vmatprep.subr.bf16.mxu0 0
    %1194 = vmatpush1.bf16.msra.mxu0 0
    %1195 = vmatprep.subr.bf16.mxu0 0
    %1196 = vmatpush1.bf16.msra.mxu0 0
    %1197 = vmatprep.subr.bf16.mxu0 0
    %1198 = vmatpush1.bf16.msra.mxu0 0
    %1199 = vmatprep.subr.bf16.mxu0 0
    %1200 = vmatpush1.bf16.msra.mxu0 0
    %1201 = vmatprep.subr.bf16.mxu0 0
    %1202 = vmatpush1.bf16.msra.mxu0 0
    %1203 = vmatprep.subr.bf16.mxu0 0
    %1204 = vmatpush1.bf16.msra.mxu0 0
    %1205 = vmatprep.subr.bf16.mxu0 0
    %1206 = vmatpush1.bf16.msra.mxu0 0
    %1207 = vmatprep.mubr.bf16.mxu0 0
    %1208 = vmatmul.mubr.bf16.gmra.mrb[0].mxu0 %v1084
    %v1209 = vpop.f32.mrb[0].mxu0
    %v1210 = vadd.f32 0.0, %v1209
    %v1211 = vpop.f32.mrb[0].mxu0
    %v1212 = vadd.f32 0.0, %v1211
    %v1213 = vpop.f32.mrb[0].mxu0
    %v1214 = vpop.f32.mrb[0].mxu0
    %1215 = vdwg.mxu0
    %1216 = vmatprep.subr.bf16.mxu0 %v718
    %1217 = vmatpush1.bf16.msra.mxu0 %v717
    %1218 = vmatprep.subr.bf16.mxu0 %v726
    %1219 = vmatpush1.bf16.msra.mxu0 %v725
    %1220 = vmatprep.subr.bf16.mxu0 %v734
    %1221 = vmatpush1.bf16.msra.mxu0 %v733
    %1222 = vmatprep.subr.bf16.mxu0 %v742
    %1223 = vmatpush1.bf16.msra.mxu0 %v741
    %1224 = vmatprep.subr.bf16.mxu0 %v750
    %1225 = vmatpush1.bf16.msra.mxu0 %v749
    %1226 = vmatprep.subr.bf16.mxu0 %v758
    %1227 = vmatpush1.bf16.msra.mxu0 %v757
    %1228 = vmatprep.subr.bf16.mxu0 %v766
    %1229 = vmatpush1.bf16.msra.mxu0 %v765
    %1230 = vmatprep.subr.bf16.mxu0 %v774
    %1231 = vmatpush1.bf16.msra.mxu0 %v773
    %1232 = vmatprep.subr.bf16.mxu0 0
    %1233 = vmatpush1.bf16.msra.mxu0 0
    %1234 = vmatprep.subr.bf16.mxu0 0
    %1235 = vmatpush1.bf16.msra.mxu0 0
    %1236 = vmatprep.subr.bf16.mxu0 0
    %1237 = vmatpush1.bf16.msra.mxu0 0
    %1238 = vmatprep.subr.bf16.mxu0 0
    %1239 = vmatpush1.bf16.msra.mxu0 0
    %1240 = vmatprep.subr.bf16.mxu0 0
    %1241 = vmatpush1.bf16.msra.mxu0 0
    %1242 = vmatprep.subr.bf16.mxu0 0
    %1243 = vmatpush1.bf16.msra.mxu0 0
    %1244 = vmatprep.subr.bf16.mxu0 0
    %1245 = vmatpush1.bf16.msra.mxu0 0
    %1246 = vmatprep.subr.bf16.mxu0 0
    %1247 = vmatpush1.bf16.msra.mxu0 0
    %1248 = vmatprep.mubr.bf16.mxu0 0
    %1249 = vmatmul.mubr.bf16.gmra.mrb[0].mxu0 %v1084
    %v1250 = vpop.f32.mrb[0].mxu0
    %v1251 = vadd.f32 0.0, %v1250
    %v1252 = vpop.f32.mrb[0].mxu0
    %v1253 = vadd.f32 0.0, %v1252
    %v1254 = vpop.f32.mrb[0].mxu0
    %v1255 = vpop.f32.mrb[0].mxu0
    %1256 = vdwg.mxu0
    %v1257 = vadd.f32 %v1085, %v1128
    %v1258 = vadd.f32 %v1086, %v1130
    %v1259 = vadd.f32 %v1087, %v1169
    %v1260 = vadd.f32 %v1088, %v1171
    %v1261 = vadd.f32 %v1089, %v1210
    %v1262 = vadd.f32 %v1090, %v1212
    %v1263 = vadd.f32 %v1091, %v1251
    %v1264 = vadd.f32 %v1092, %v1253
    %v1265 = vsel %vm412, %v1257, %v1261
    %v1266 = vsel %vm412, %v1258, %v1262
    %v1267 = vsel %vm412, %v1259, %v1263
    %v1268 = vsel %vm412, %v1260, %v1264
    %v1269 = vmul.f32 %v1265, 0.5
    %v1270 = vtanh.pop %v1269
    %v1271 = vadd.f32 %v1270, 1.0
    %v1272 = vmul.f32 %v1271, 0.5
    %v1273 = vmul.f32 %v1266, 0.5
    %v1274 = vtanh.pop %v1273
    %v1275 = vadd.f32 %v1274, 1.0
    %v1276 = vmul.f32 %v1275, 0.5
    %v1277 = vtanh.pop %v1267
    %v1278 = vmul.f32 %v1268, 0.5
    %v1279 = vtanh.pop %v1278
    %v1280 = vadd.f32 %v1279, 1.0
    %v1281 = vmul.f32 %v1280, 0.5
    %v1282 = vmul.f32 %v1276, %v1078
    %v1283 = vmul.f32 %v1272, %v1277
    %v1284 = vadd.f32 %v1282, %v1283
    %v1285 = vtanh.pop %v1284
    %v1286 = vmul.f32 %v1281, %v1285
    %v1287 = vld [vmem:[%s4 + $0x8] sm:$0xf]
    %v1288 = vmul.f32 %v1286, %v1287
    %v1289 = vadd.f32 %v1083, %v1288
    %v1290 = vpack.c.bf16 %v1286, %v1286
    %v1291 = vld [vmem:[#allocation2 + $0x40] sm:$0xf0]
    %v1292 = vld [vmem:[#allocation2 + $0x48] sm:$0xf0]
    %v1293 = vld [vmem:[#allocation2 + $0x50] sm:$0xf0]
    %v1294 = vld [vmem:[#allocation2 + $0x58] sm:$0xf0]
    %v1295 = vld [vmem:[#allocation2 + $0x60] sm:$0xf0]
    %v1296 = vld [vmem:[#allocation2 + $0x68] sm:$0xf0]
    %v1297 = vld [vmem:[#allocation2 + $0x70] sm:$0xf0]
    %v1298 = vld [vmem:[#allocation2 + $0x78] sm:$0xf0]
    %1299 = vmatprep.subr.bf16.mxu0 %v712
    %1300 = vmatpush1.bf16.msra.mxu0 %v711
    %1301 = vmatprep.subr.bf16.mxu0 %v720
    %1302 = vmatpush1.bf16.msra.mxu0 %v719
    %1303 = vmatprep.subr.bf16.mxu0 %v728
    %1304 = vmatpush1.bf16.msra.mxu0 %v727
    %1305 = vmatprep.subr.bf16.mxu0 %v736
    %1306 = vmatpush1.bf16.msra.mxu0 %v735
    %1307 = vmatprep.subr.bf16.mxu0 %v744
    %1308 = vmatpush1.bf16.msra.mxu0 %v743
    %1309 = vmatprep.subr.bf16.mxu0 %v752
    %1310 = vmatpush1.bf16.msra.mxu0 %v751
    %1311 = vmatprep.subr.bf16.mxu0 %v760
    %1312 = vmatpush1.bf16.msra.mxu0 %v759
    %1313 = vmatprep.subr.bf16.mxu0 %v768
    %1314 = vmatpush1.bf16.msra.mxu0 %v767
    %1315 = vmatprep.subr.bf16.mxu0 0
    %1316 = vmatpush1.bf16.msra.mxu0 0
    %1317 = vmatprep.subr.bf16.mxu0 0
    %1318 = vmatpush1.bf16.msra.mxu0 0
    %1319 = vmatprep.subr.bf16.mxu0 0
    %1320 = vmatpush1.bf16.msra.mxu0 0
    %1321 = vmatprep.subr.bf16.mxu0 0
    %1322 = vmatpush1.bf16.msra.mxu0 0
    %1323 = vmatprep.subr.bf16.mxu0 0
    %1324 = vmatpush1.bf16.msra.mxu0 0
    %1325 = vmatprep.subr.bf16.mxu0 0
    %1326 = vmatpush1.bf16.msra.mxu0 0
    %1327 = vmatprep.subr.bf16.mxu0 0
    %1328 = vmatpush1.bf16.msra.mxu0 0
    %1329 = vmatprep.subr.bf16.mxu0 0
    %1330 = vmatpush1.bf16.msra.mxu0 0
    %1331 = vmatprep.mubr.bf16.mxu0 0
    %1332 = vmatmul.mubr.bf16.gmra.mrb[0].mxu0 %v1290
    %v1333 = vpop.f32.mrb[0].mxu0
    %v1334 = vadd.f32 0.0, %v1333
    %v1335 = vpop.f32.mrb[0].mxu0
    %v1336 = vadd.f32 0.0, %v1335
    %v1337 = vpop.f32.mrb[0].mxu0
    %v1338 = vpop.f32.mrb[0].mxu0
    %1339 = vdwg.mxu0
    %1340 = vmatprep.subr.bf16.mxu0 %v714
    %1341 = vmatpush1.bf16.msra.mxu0 %v713
    %1342 = vmatprep.subr.bf16.mxu0 %v722
    %1343 = vmatpush1.bf16.msra.mxu0 %v721
    %1344 = vmatprep.subr.bf16.mxu0 %v730
    %1345 = vmatpush1.bf16.msra.mxu0 %v729
    %1346 = vmatprep.subr.bf16.mxu0 %v738
    %1347 = vmatpush1.bf16.msra.mxu0 %v737
    %1348 = vmatprep.subr.bf16.mxu0 %v746
    %1349 = vmatpush1.bf16.msra.mxu0 %v745
    %1350 = vmatprep.subr.bf16.mxu0 %v754
    %1351 = vmatpush1.bf16.msra.mxu0 %v753
    %1352 = vmatprep.subr.bf16.mxu0 %v762
    %1353 = vmatpush1.bf16.msra.mxu0 %v761
    %1354 = vmatprep.subr.bf16.mxu0 %v770
    %1355 = vmatpush1.bf16.msra.mxu0 %v769
    %1356 = vmatprep.subr.bf16.mxu0 0
    %1357 = vmatpush1.bf16.msra.mxu0 0
    %1358 = vmatprep.subr.bf16.mxu0 0
    %1359 = vmatpush1.bf16.msra.mxu0 0
    %1360 = vmatprep.subr.bf16.mxu0 0
    %1361 = vmatpush1.bf16.msra.mxu0 0
    %1362 = vmatprep.subr.bf16.mxu0 0
    %1363 = vmatpush1.bf16.msra.mxu0 0
    %1364 = vmatprep.subr.bf16.mxu0 0
    %1365 = vmatpush1.bf16.msra.mxu0 0
    %1366 = vmatprep.subr.bf16.mxu0 0
    %1367 = vmatpush1.bf16.msra.mxu0 0
    %1368 = vmatprep.subr.bf16.mxu0 0
    %1369 = vmatpush1.bf16.msra.mxu0 0
    %1370 = vmatprep.subr.bf16.mxu0 0
    %1371 = vmatpush1.bf16.msra.mxu0 0
    %1372 = vmatprep.mubr.bf16.mxu0 0
    %1373 = vmatmul.mubr.bf16.gmra.mrb[0].mxu0 %v1290
    %v1374 = vpop.f32.mrb[0].mxu0
    %v1375 = vadd.f32 0.0, %v1374
    %v1376 = vpop.f32.mrb[0].mxu0
    %v1377 = vadd.f32 0.0, %v1376
    %v1378 = vpop.f32.mrb[0].mxu0
    %v1379 = vpop.f32.mrb[0].mxu0
    %1380 = vdwg.mxu0
    %1381 = vmatprep.subr.bf16.mxu0 %v716
    %1382 = vmatpush1.bf16.msra.mxu0 %v715
    %1383 = vmatprep.subr.bf16.mxu0 %v724
    %1384 = vmatpush1.bf16.msra.mxu0 %v723
    %1385 = vmatprep.subr.bf16.mxu0 %v732
    %1386 = vmatpush1.bf16.msra.mxu0 %v731
    %1387 = vmatprep.subr.bf16.mxu0 %v740
    %1388 = vmatpush1.bf16.msra.mxu0 %v739
    %1389 = vmatprep.subr.bf16.mxu0 %v748
    %1390 = vmatpush1.bf16.msra.mxu0 %v747
    %1391 = vmatprep.subr.bf16.mxu0 %v756
    %1392 = vmatpush1.bf16.msra.mxu0 %v755
    %1393 = vmatprep.subr.bf16.mxu0 %v764
    %1394 = vmatpush1.bf16.msra.mxu0 %v763
    %1395 = vmatprep.subr.bf16.mxu0 %v772
    %1396 = vmatpush1.bf16.msra.mxu0 %v771
    %1397 = vmatprep.subr.bf16.mxu0 0
    %1398 = vmatpush1.bf16.msra.mxu0 0
    %1399 = vmatprep.subr.bf16.mxu0 0
    %1400 = vmatpush1.bf16.msra.mxu0 0
    %1401 = vmatprep.subr.bf16.mxu0 0
    %1402 = vmatpush1.bf16.msra.mxu0 0
    %1403 = vmatprep.subr.bf16.mxu0 0
    %1404 = vmatpush1.bf16.msra.mxu0 0
    %1405 = vmatprep.subr.bf16.mxu0 0
    %1406 = vmatpush1.bf16.msra.mxu0 0
    %1407 = vmatprep.subr.bf16.mxu0 0
    %1408 = vmatpush1.bf16.msra.mxu0 0
    %1409 = vmatprep.subr.bf16.mxu0 0
    %1410 = vmatpush1.bf16.msra.mxu0 0
    %1411 = vmatprep.subr.bf16.mxu0 0
    %1412 = vmatpush1.bf16.msra.mxu0 0
    %1413 = vmatprep.mubr.bf16.mxu0 0
    %1414 = vmatmul.mubr.bf16.gmra.mrb[0].mxu0 %v1290
    %v1415 = vpop.f32.mrb[0].mxu0
    %v1416 = vadd.f32 0.0, %v1415
    %v1417 = vpop.f32.mrb[0].mxu0
    %v1418 = vadd.f32 0.0, %v1417
    %v1419 = vpop.f32.mrb[0].mxu0
    %v1420 = vpop.f32.mrb[0].mxu0
    %1421 = vdwg.mxu0
    %1422 = vmatprep.subr.bf16.mxu0 %v718
    %1423 = vmatpush1.bf16.msra.mxu0 %v717
    %1424 = vmatprep.subr.bf16.mxu0 %v726
    %1425 = vmatpush1.bf16.msra.mxu0 %v725
    %1426 = vmatprep.subr.bf16.mxu0 %v734
    %1427 = vmatpush1.bf16.msra.mxu0 %v733
    %1428 = vmatprep.subr.bf16.mxu0 %v742
    %1429 = vmatpush1.bf16.msra.mxu0 %v741
    %1430 = vmatprep.subr.bf16.mxu0 %v750
    %1431 = vmatpush1.bf16.msra.mxu0 %v749
    %1432 = vmatprep.subr.bf16.mxu0 %v758
    %1433 = vmatpush1.bf16.msra.mxu0 %v757
    %1434 = vmatprep.subr.bf16.mxu0 %v766
    %1435 = vmatpush1.bf16.msra.mxu0 %v765
    %1436 = vmatprep.subr.bf16.mxu0 %v774
    %1437 = vmatpush1.bf16.msra.mxu0 %v773
    %1438 = vmatprep.subr.bf16.mxu0 0
    %1439 = vmatpush1.bf16.msra.mxu0 0
    %1440 = vmatprep.subr.bf16.mxu0 0
    %1441 = vmatpush1.bf16.msra.mxu0 0
    %1442 = vmatprep.subr.bf16.mxu0 0
    %1443 = vmatpush1.bf16.msra.mxu0 0
    %1444 = vmatprep.subr.bf16.mxu0 0
    %1445 = vmatpush1.bf16.msra.mxu0 0
    %1446 = vmatprep.subr.bf16.mxu0 0
    %1447 = vmatpush1.bf16.msra.mxu0 0
    %1448 = vmatprep.subr.bf16.mxu0 0
    %1449 = vmatpush1.bf16.msra.mxu0 0
    %1450 = vmatprep.subr.bf16.mxu0 0
    %1451 = vmatpush1.bf16.msra.mxu0 0
    %1452 = vmatprep.subr.bf16.mxu0 0
    %1453 = vmatpush1.bf16.msra.mxu0 0
    %1454 = vmatprep.mubr.bf16.mxu0 0
    %1455 = vmatmul.mubr.bf16.gmra.mrb[0].mxu0 %v1290
    %v1456 = vpop.f32.mrb[0].mxu0
    %v1457 = vadd.f32 0.0, %v1456
    %v1458 = vpop.f32.mrb[0].mxu0
    %v1459 = vadd.f32 0.0, %v1458
    %v1460 = vpop.f32.mrb[0].mxu0
    %v1461 = vpop.f32.mrb[0].mxu0
    %1462 = vdwg.mxu0
    %v1471 = vrot.slane %v1334, 4
    %v1472 = vrot.slane %v1336, 4
    %v1473 = vrot.slane %v1375, 4
    %v1474 = vrot.slane %v1377, 4
    %v1475 = vrot.slane %v1416, 4
    %v1476 = vrot.slane %v1418, 4
    %v1477 = vrot.slane %v1457, 4
    %v1478 = vrot.slane %v1459, 4
    %v1487 = vadd.f32 %v1291, %v1471
    %v1488 = vadd.f32 %v1292, %v1472
    %v1489 = vadd.f32 %v1293, %v1473
    %v1490 = vadd.f32 %v1294, %v1474
    %v1491 = vadd.f32 %v1295, %v1475
    %v1492 = vadd.f32 %v1296, %v1476
    %v1493 = vadd.f32 %v1297, %v1477
    %v1494 = vadd.f32 %v1298, %v1478
    %v1499 = vrot.slane %v1487, 4
    %v1500 = vrot.slane %v1488, 4
    %v1501 = vrot.slane %v1489, 4
    %v1502 = vrot.slane %v1490, 4
    %v1511 = vrot.slane %v1491, 4
    %v1512 = vrot.slane %v1492, 4
    %v1513 = vrot.slane %v1493, 4
    %v1514 = vrot.slane %v1494, 4
    %v1519 = vsel %vm412, %v1499, %v1511
    %v1520 = vsel %vm412, %v1500, %v1512
    %v1521 = vsel %vm412, %v1501, %v1513
    %v1522 = vsel %vm412, %v1502, %v1514
    %v1523 = vmul.f32 %v1519, 0.5
    %v1524 = vtanh.pop %v1523
    %v1525 = vadd.f32 %v1524, 1.0
    %v1526 = vmul.f32 %v1525, 0.5
    %v1527 = vmul.f32 %v1520, 0.5
    %v1528 = vtanh.pop %v1527
    %v1529 = vadd.f32 %v1528, 1.0
    %v1530 = vmul.f32 %v1529, 0.5
    %v1531 = vtanh.pop %v1521
    %v1532 = vmul.f32 %v1522, 0.5
    %v1533 = vtanh.pop %v1532
    %v1534 = vadd.f32 %v1533, 1.0
    %v1535 = vmul.f32 %v1534, 0.5
    %v1536 = vmul.f32 %v1530, %v1284
    %v1537 = vmul.f32 %v1526, %v1531
    %v1538 = vadd.f32 %v1536, %v1537
    %v1539 = vtanh.pop %v1538
    %v1540 = vmul.f32 %v1535, %v1539
    %v1541 = vld [vmem:[%s4 + $0xc] sm:$0xf]
    %v1542 = vmul.f32 %v1540, %v1541
    %v1543 = vadd.f32 %v1289, %v1542
    %v1544 = vpack.c.bf16 %v1540, %v1540
    %v1545 = vld [vmem:[#allocation2 + $0x80] sm:$0xf]
    %v1546 = vld [vmem:[#allocation2 + $0x88] sm:$0xf]
    %v1547 = vld [vmem:[#allocation2 + $0x90] sm:$0xf]
    %v1548 = vld [vmem:[#allocation2 + $0x98] sm:$0xf]
    %v1549 = vld [vmem:[#allocation2 + $0xa0] sm:$0xf]
    %v1550 = vld [vmem:[#allocation2 + $0xa8] sm:$0xf]
    %v1551 = vld [vmem:[#allocation2 + $0xb0] sm:$0xf]
    %v1552 = vld [vmem:[#allocation2 + $0xb8] sm:$0xf]
    %1553 = vmatprep.subr.bf16.mxu0 %v712
    %1554 = vmatpush1.bf16.msra.mxu0 %v711
    %1555 = vmatprep.subr.bf16.mxu0 %v720
    %1556 = vmatpush1.bf16.msra.mxu0 %v719
    %1557 = vmatprep.subr.bf16.mxu0 %v728
    %1558 = vmatpush1.bf16.msra.mxu0 %v727
    %1559 = vmatprep.subr.bf16.mxu0 %v736
    %1560 = vmatpush1.bf16.msra.mxu0 %v735
    %1561 = vmatprep.subr.bf16.mxu0 %v744
    %1562 = vmatpush1.bf16.msra.mxu0 %v743
    %1563 = vmatprep.subr.bf16.mxu0 %v752
    %1564 = vmatpush1.bf16.msra.mxu0 %v751
    %1565 = vmatprep.subr.bf16.mxu0 %v760
    %1566 = vmatpush1.bf16.msra.mxu0 %v759
    %1567 = vmatprep.subr.bf16.mxu0 %v768
    %1568 = vmatpush1.bf16.msra.mxu0 %v767
    %1569 = vmatprep.subr.bf16.mxu0 0
    %1570 = vmatpush1.bf16.msra.mxu0 0
    %1571 = vmatprep.subr.bf16.mxu0 0
    %1572 = vmatpush1.bf16.msra.mxu0 0
    %1573 = vmatprep.subr.bf16.mxu0 0
    %1574 = vmatpush1.bf16.msra.mxu0 0
    %1575 = vmatprep.subr.bf16.mxu0 0
    %1576 = vmatpush1.bf16.msra.mxu0 0
    %1577 = vmatprep.subr.bf16.mxu0 0
    %1578 = vmatpush1.bf16.msra.mxu0 0
    %1579 = vmatprep.subr.bf16.mxu0 0
    %1580 = vmatpush1.bf16.msra.mxu0 0
    %1581 = vmatprep.subr.bf16.mxu0 0
    %1582 = vmatpush1.bf16.msra.mxu0 0
    %1583 = vmatprep.subr.bf16.mxu0 0
    %1584 = vmatpush1.bf16.msra.mxu0 0
    %1585 = vmatprep.mubr.bf16.mxu0 0
    %1586 = vmatmul.mubr.bf16.gmra.mrb[0].mxu0 %v1544
    %v1587 = vpop.f32.mrb[0].mxu0
    %v1588 = vadd.f32 0.0, %v1587
    %v1589 = vpop.f32.mrb[0].mxu0
    %v1590 = vadd.f32 0.0, %v1589
    %v1591 = vpop.f32.mrb[0].mxu0
    %v1592 = vpop.f32.mrb[0].mxu0
    %1593 = vdwg.mxu0
    %1594 = vmatprep.subr.bf16.mxu0 %v714
    %1595 = vmatpush1.bf16.msra.mxu0 %v713
    %1596 = vmatprep.subr.bf16.mxu0 %v722
    %1597 = vmatpush1.bf16.msra.mxu0 %v721
    %1598 = vmatprep.subr.bf16.mxu0 %v730
    %1599 = vmatpush1.bf16.msra.mxu0 %v729
    %1600 = vmatprep.subr.bf16.mxu0 %v738
    %1601 = vmatpush1.bf16.msra.mxu0 %v737
    %1602 = vmatprep.subr.bf16.mxu0 %v746
    %1603 = vmatpush1.bf16.msra.mxu0 %v745
    %1604 = vmatprep.subr.bf16.mxu0 %v754
    %1605 = vmatpush1.bf16.msra.mxu0 %v753
    %1606 = vmatprep.subr.bf16.mxu0 %v762
    %1607 = vmatpush1.bf16.msra.mxu0 %v761
    %1608 = vmatprep.subr.bf16.mxu0 %v770
    %1609 = vmatpush1.bf16.msra.mxu0 %v769
    %1610 = vmatprep.subr.bf16.mxu0 0
    %1611 = vmatpush1.bf16.msra.mxu0 0
    %1612 = vmatprep.subr.bf16.mxu0 0
    %1613 = vmatpush1.bf16.msra.mxu0 0
    %1614 = vmatprep.subr.bf16.mxu0 0
    %1615 = vmatpush1.bf16.msra.mxu0 0
    %1616 = vmatprep.subr.bf16.mxu0 0
    %1617 = vmatpush1.bf16.msra.mxu0 0
    %1618 = vmatprep.subr.bf16.mxu0 0
    %1619 = vmatpush1.bf16.msra.mxu0 0
    %1620 = vmatprep.subr.bf16.mxu0 0
    %1621 = vmatpush1.bf16.msra.mxu0 0
    %1622 = vmatprep.subr.bf16.mxu0 0
    %1623 = vmatpush1.bf16.msra.mxu0 0
    %1624 = vmatprep.subr.bf16.mxu0 0
    %1625 = vmatpush1.bf16.msra.mxu0 0
    %1626 = vmatprep.mubr.bf16.mxu0 0
    %1627 = vmatmul.mubr.bf16.gmra.mrb[0].mxu0 %v1544
    %v1628 = vpop.f32.mrb[0].mxu0
    %v1629 = vadd.f32 0.0, %v1628
    %v1630 = vpop.f32.mrb[0].mxu0
    %v1631 = vadd.f32 0.0, %v1630
    %v1632 = vpop.f32.mrb[0].mxu0
    %v1633 = vpop.f32.mrb[0].mxu0
    %1634 = vdwg.mxu0
    %1635 = vmatprep.subr.bf16.mxu0 %v716
    %1636 = vmatpush1.bf16.msra.mxu0 %v715
    %1637 = vmatprep.subr.bf16.mxu0 %v724
    %1638 = vmatpush1.bf16.msra.mxu0 %v723
    %1639 = vmatprep.subr.bf16.mxu0 %v732
    %1640 = vmatpush1.bf16.msra.mxu0 %v731
    %1641 = vmatprep.subr.bf16.mxu0 %v740
    %1642 = vmatpush1.bf16.msra.mxu0 %v739
    %1643 = vmatprep.subr.bf16.mxu0 %v748
    %1644 = vmatpush1.bf16.msra.mxu0 %v747
    %1645 = vmatprep.subr.bf16.mxu0 %v756
    %1646 = vmatpush1.bf16.msra.mxu0 %v755
    %1647 = vmatprep.subr.bf16.mxu0 %v764
    %1648 = vmatpush1.bf16.msra.mxu0 %v763
    %1649 = vmatprep.subr.bf16.mxu0 %v772
    %1650 = vmatpush1.bf16.msra.mxu0 %v771
    %1651 = vmatprep.subr.bf16.mxu0 0
    %1652 = vmatpush1.bf16.msra.mxu0 0
    %1653 = vmatprep.subr.bf16.mxu0 0
    %1654 = vmatpush1.bf16.msra.mxu0 0
    %1655 = vmatprep.subr.bf16.mxu0 0
    %1656 = vmatpush1.bf16.msra.mxu0 0
    %1657 = vmatprep.subr.bf16.mxu0 0
    %1658 = vmatpush1.bf16.msra.mxu0 0
    %1659 = vmatprep.subr.bf16.mxu0 0
    %1660 = vmatpush1.bf16.msra.mxu0 0
    %1661 = vmatprep.subr.bf16.mxu0 0
    %1662 = vmatpush1.bf16.msra.mxu0 0
    %1663 = vmatprep.subr.bf16.mxu0 0
    %1664 = vmatpush1.bf16.msra.mxu0 0
    %1665 = vmatprep.subr.bf16.mxu0 0
    %1666 = vmatpush1.bf16.msra.mxu0 0
    %1667 = vmatprep.mubr.bf16.mxu0 0
    %1668 = vmatmul.mubr.bf16.gmra.mrb[0].mxu0 %v1544
    %v1669 = vpop.f32.mrb[0].mxu0
    %v1670 = vadd.f32 0.0, %v1669
    %v1671 = vpop.f32.mrb[0].mxu0
    %v1672 = vadd.f32 0.0, %v1671
    %v1673 = vpop.f32.mrb[0].mxu0
    %v1674 = vpop.f32.mrb[0].mxu0
    %1675 = vdwg.mxu0
    %1676 = vmatprep.subr.bf16.mxu0 %v718
    %1677 = vmatpush1.bf16.msra.mxu0 %v717
    %1678 = vmatprep.subr.bf16.mxu0 %v726
    %1679 = vmatpush1.bf16.msra.mxu0 %v725
    %1680 = vmatprep.subr.bf16.mxu0 %v734
    %1681 = vmatpush1.bf16.msra.mxu0 %v733
    %1682 = vmatprep.subr.bf16.mxu0 %v742
    %1683 = vmatpush1.bf16.msra.mxu0 %v741
    %1684 = vmatprep.subr.bf16.mxu0 %v750
    %1685 = vmatpush1.bf16.msra.mxu0 %v749
    %1686 = vmatprep.subr.bf16.mxu0 %v758
    %1687 = vmatpush1.bf16.msra.mxu0 %v757
    %1688 = vmatprep.subr.bf16.mxu0 %v766
    %1689 = vmatpush1.bf16.msra.mxu0 %v765
    %1690 = vmatprep.subr.bf16.mxu0 %v774
    %1691 = vmatpush1.bf16.msra.mxu0 %v773
    %1692 = vmatprep.subr.bf16.mxu0 0
    %1693 = vmatpush1.bf16.msra.mxu0 0
    %1694 = vmatprep.subr.bf16.mxu0 0
    %1695 = vmatpush1.bf16.msra.mxu0 0
    %1696 = vmatprep.subr.bf16.mxu0 0
    %1697 = vmatpush1.bf16.msra.mxu0 0
    %1698 = vmatprep.subr.bf16.mxu0 0
    %1699 = vmatpush1.bf16.msra.mxu0 0
    %1700 = vmatprep.subr.bf16.mxu0 0
    %1701 = vmatpush1.bf16.msra.mxu0 0
    %1702 = vmatprep.subr.bf16.mxu0 0
    %1703 = vmatpush1.bf16.msra.mxu0 0
    %1704 = vmatprep.subr.bf16.mxu0 0
    %1705 = vmatpush1.bf16.msra.mxu0 0
    %1706 = vmatprep.subr.bf16.mxu0 0
    %1707 = vmatpush1.bf16.msra.mxu0 0
    %1708 = vmatprep.mubr.bf16.mxu0 0
    %1709 = vmatmul.mubr.bf16.gmra.mrb[0].mxu0 %v1544
    %v1710 = vpop.f32.mrb[0].mxu0
    %v1711 = vadd.f32 0.0, %v1710
    %v1712 = vpop.f32.mrb[0].mxu0
    %v1713 = vadd.f32 0.0, %v1712
    %v1714 = vpop.f32.mrb[0].mxu0
    %v1715 = vpop.f32.mrb[0].mxu0
    %1716 = vdwg.mxu0
    %v1717 = vadd.f32 %v1545, %v1588
    %v1718 = vadd.f32 %v1546, %v1590
    %v1719 = vadd.f32 %v1547, %v1629
    %v1720 = vadd.f32 %v1548, %v1631
    %v1721 = vadd.f32 %v1549, %v1670
    %v1722 = vadd.f32 %v1550, %v1672
    %v1723 = vadd.f32 %v1551, %v1711
    %v1724 = vadd.f32 %v1552, %v1713
    %v1725 = vsel %vm412, %v1717, %v1721
    %v1726 = vsel %vm412, %v1718, %v1722
    %v1727 = vsel %vm412, %v1719, %v1723
    %v1728 = vsel %vm412, %v1720, %v1724
    %v1729 = vmul.f32 %v1725, 0.5
    %v1730 = vtanh.pop %v1729
    %v1731 = vadd.f32 %v1730, 1.0
    %v1732 = vmul.f32 %v1731, 0.5
    %v1733 = vmul.f32 %v1726, 0.5
    %v1734 = vtanh.pop %v1733
    %v1735 = vadd.f32 %v1734, 1.0
    %v1736 = vmul.f32 %v1735, 0.5
    %v1737 = vtanh.pop %v1727
    %v1738 = vmul.f32 %v1728, 0.5
    %v1739 = vtanh.pop %v1738
    %v1740 = vadd.f32 %v1739, 1.0
    %v1741 = vmul.f32 %v1740, 0.5
    %v1742 = vmul.f32 %v1736, %v1538
    %v1743 = vmul.f32 %v1732, %v1737
    %v1744 = vadd.f32 %v1742, %v1743
    %v1745 = vtanh.pop %v1744
    %v1746 = vmul.f32 %v1741, %v1745
    %v1747 = vld [vmem:[%s4 + $0x10] sm:$0xf]
    %v1748 = vmul.f32 %v1746, %v1747
    %v1749 = vadd.f32 %v1543, %v1748
    %v1750 = vpack.c.bf16 %v1746, %v1746
    %v1751 = vld [vmem:[#allocation2 + $0x80] sm:$0xf0]
    %v1752 = vld [vmem:[#allocation2 + $0x88] sm:$0xf0]
    %v1753 = vld [vmem:[#allocation2 + $0x90] sm:$0xf0]
    %v1754 = vld [vmem:[#allocation2 + $0x98] sm:$0xf0]
    %v1755 = vld [vmem:[#allocation2 + $0xa0] sm:$0xf0]
    %v1756 = vld [vmem:[#allocation2 + $0xa8] sm:$0xf0]
    %v1757 = vld [vmem:[#allocation2 + $0xb0] sm:$0xf0]
    %v1758 = vld [vmem:[#allocation2 + $0xb8] sm:$0xf0]
    %1759 = vmatprep.subr.bf16.mxu0 %v712
    %1760 = vmatpush1.bf16.msra.mxu0 %v711
    %1761 = vmatprep.subr.bf16.mxu0 %v720
    %1762 = vmatpush1.bf16.msra.mxu0 %v719
    %1763 = vmatprep.subr.bf16.mxu0 %v728
    %1764 = vmatpush1.bf16.msra.mxu0 %v727
    %1765 = vmatprep.subr.bf16.mxu0 %v736
    %1766 = vmatpush1.bf16.msra.mxu0 %v735
    %1767 = vmatprep.subr.bf16.mxu0 %v744
    %1768 = vmatpush1.bf16.msra.mxu0 %v743
    %1769 = vmatprep.subr.bf16.mxu0 %v752
    %1770 = vmatpush1.bf16.msra.mxu0 %v751
    %1771 = vmatprep.subr.bf16.mxu0 %v760
    %1772 = vmatpush1.bf16.msra.mxu0 %v759
    %1773 = vmatprep.subr.bf16.mxu0 %v768
    %1774 = vmatpush1.bf16.msra.mxu0 %v767
    %1775 = vmatprep.subr.bf16.mxu0 0
    %1776 = vmatpush1.bf16.msra.mxu0 0
    %1777 = vmatprep.subr.bf16.mxu0 0
    %1778 = vmatpush1.bf16.msra.mxu0 0
    %1779 = vmatprep.subr.bf16.mxu0 0
    %1780 = vmatpush1.bf16.msra.mxu0 0
    %1781 = vmatprep.subr.bf16.mxu0 0
    %1782 = vmatpush1.bf16.msra.mxu0 0
    %1783 = vmatprep.subr.bf16.mxu0 0
    %1784 = vmatpush1.bf16.msra.mxu0 0
    %1785 = vmatprep.subr.bf16.mxu0 0
    %1786 = vmatpush1.bf16.msra.mxu0 0
    %1787 = vmatprep.subr.bf16.mxu0 0
    %1788 = vmatpush1.bf16.msra.mxu0 0
    %1789 = vmatprep.subr.bf16.mxu0 0
    %1790 = vmatpush1.bf16.msra.mxu0 0
    %1791 = vmatprep.mubr.bf16.mxu0 0
    %1792 = vmatmul.mubr.bf16.gmra.mrb[0].mxu0 %v1750
    %v1793 = vpop.f32.mrb[0].mxu0
    %v1794 = vadd.f32 0.0, %v1793
    %v1795 = vpop.f32.mrb[0].mxu0
    %v1796 = vadd.f32 0.0, %v1795
    %v1797 = vpop.f32.mrb[0].mxu0
    %v1798 = vpop.f32.mrb[0].mxu0
    %1799 = vdwg.mxu0
    %1800 = vmatprep.subr.bf16.mxu0 %v714
    %1801 = vmatpush1.bf16.msra.mxu0 %v713
    %1802 = vmatprep.subr.bf16.mxu0 %v722
    %1803 = vmatpush1.bf16.msra.mxu0 %v721
    %1804 = vmatprep.subr.bf16.mxu0 %v730
    %1805 = vmatpush1.bf16.msra.mxu0 %v729
    %1806 = vmatprep.subr.bf16.mxu0 %v738
    %1807 = vmatpush1.bf16.msra.mxu0 %v737
    %1808 = vmatprep.subr.bf16.mxu0 %v746
    %1809 = vmatpush1.bf16.msra.mxu0 %v745
    %1810 = vmatprep.subr.bf16.mxu0 %v754
    %1811 = vmatpush1.bf16.msra.mxu0 %v753
    %1812 = vmatprep.subr.bf16.mxu0 %v762
    %1813 = vmatpush1.bf16.msra.mxu0 %v761
    %1814 = vmatprep.subr.bf16.mxu0 %v770
    %1815 = vmatpush1.bf16.msra.mxu0 %v769
    %1816 = vmatprep.subr.bf16.mxu0 0
    %1817 = vmatpush1.bf16.msra.mxu0 0
    %1818 = vmatprep.subr.bf16.mxu0 0
    %1819 = vmatpush1.bf16.msra.mxu0 0
    %1820 = vmatprep.subr.bf16.mxu0 0
    %1821 = vmatpush1.bf16.msra.mxu0 0
    %1822 = vmatprep.subr.bf16.mxu0 0
    %1823 = vmatpush1.bf16.msra.mxu0 0
    %1824 = vmatprep.subr.bf16.mxu0 0
    %1825 = vmatpush1.bf16.msra.mxu0 0
    %1826 = vmatprep.subr.bf16.mxu0 0
    %1827 = vmatpush1.bf16.msra.mxu0 0
    %1828 = vmatprep.subr.bf16.mxu0 0
    %1829 = vmatpush1.bf16.msra.mxu0 0
    %1830 = vmatprep.subr.bf16.mxu0 0
    %1831 = vmatpush1.bf16.msra.mxu0 0
    %1832 = vmatprep.mubr.bf16.mxu0 0
    %1833 = vmatmul.mubr.bf16.gmra.mrb[0].mxu0 %v1750
    %v1834 = vpop.f32.mrb[0].mxu0
    %v1835 = vadd.f32 0.0, %v1834
    %v1836 = vpop.f32.mrb[0].mxu0
    %v1837 = vadd.f32 0.0, %v1836
    %v1838 = vpop.f32.mrb[0].mxu0
    %v1839 = vpop.f32.mrb[0].mxu0
    %1840 = vdwg.mxu0
    %1841 = vmatprep.subr.bf16.mxu0 %v716
    %1842 = vmatpush1.bf16.msra.mxu0 %v715
    %1843 = vmatprep.subr.bf16.mxu0 %v724
    %1844 = vmatpush1.bf16.msra.mxu0 %v723
    %1845 = vmatprep.subr.bf16.mxu0 %v732
    %1846 = vmatpush1.bf16.msra.mxu0 %v731
    %1847 = vmatprep.subr.bf16.mxu0 %v740
    %1848 = vmatpush1.bf16.msra.mxu0 %v739
    %1849 = vmatprep.subr.bf16.mxu0 %v748
    %1850 = vmatpush1.bf16.msra.mxu0 %v747
    %1851 = vmatprep.subr.bf16.mxu0 %v756
    %1852 = vmatpush1.bf16.msra.mxu0 %v755
    %1853 = vmatprep.subr.bf16.mxu0 %v764
    %1854 = vmatpush1.bf16.msra.mxu0 %v763
    %1855 = vmatprep.subr.bf16.mxu0 %v772
    %1856 = vmatpush1.bf16.msra.mxu0 %v771
    %1857 = vmatprep.subr.bf16.mxu0 0
    %1858 = vmatpush1.bf16.msra.mxu0 0
    %1859 = vmatprep.subr.bf16.mxu0 0
    %1860 = vmatpush1.bf16.msra.mxu0 0
    %1861 = vmatprep.subr.bf16.mxu0 0
    %1862 = vmatpush1.bf16.msra.mxu0 0
    %1863 = vmatprep.subr.bf16.mxu0 0
    %1864 = vmatpush1.bf16.msra.mxu0 0
    %1865 = vmatprep.subr.bf16.mxu0 0
    %1866 = vmatpush1.bf16.msra.mxu0 0
    %1867 = vmatprep.subr.bf16.mxu0 0
    %1868 = vmatpush1.bf16.msra.mxu0 0
    %1869 = vmatprep.subr.bf16.mxu0 0
    %1870 = vmatpush1.bf16.msra.mxu0 0
    %1871 = vmatprep.subr.bf16.mxu0 0
    %1872 = vmatpush1.bf16.msra.mxu0 0
    %1873 = vmatprep.mubr.bf16.mxu0 0
    %1874 = vmatmul.mubr.bf16.gmra.mrb[0].mxu0 %v1750
    %v1875 = vpop.f32.mrb[0].mxu0
    %v1876 = vadd.f32 0.0, %v1875
    %v1877 = vpop.f32.mrb[0].mxu0
    %v1878 = vadd.f32 0.0, %v1877
    %v1879 = vpop.f32.mrb[0].mxu0
    %v1880 = vpop.f32.mrb[0].mxu0
    %1881 = vdwg.mxu0
    %1882 = vmatprep.subr.bf16.mxu0 %v718
    %1883 = vmatpush1.bf16.msra.mxu0 %v717
    %1884 = vmatprep.subr.bf16.mxu0 %v726
    %1885 = vmatpush1.bf16.msra.mxu0 %v725
    %1886 = vmatprep.subr.bf16.mxu0 %v734
    %1887 = vmatpush1.bf16.msra.mxu0 %v733
    %1888 = vmatprep.subr.bf16.mxu0 %v742
    %1889 = vmatpush1.bf16.msra.mxu0 %v741
    %1890 = vmatprep.subr.bf16.mxu0 %v750
    %1891 = vmatpush1.bf16.msra.mxu0 %v749
    %1892 = vmatprep.subr.bf16.mxu0 %v758
    %1893 = vmatpush1.bf16.msra.mxu0 %v757
    %1894 = vmatprep.subr.bf16.mxu0 %v766
    %1895 = vmatpush1.bf16.msra.mxu0 %v765
    %1896 = vmatprep.subr.bf16.mxu0 %v774
    %1897 = vmatpush1.bf16.msra.mxu0 %v773
    %1898 = vmatprep.subr.bf16.mxu0 0
    %1899 = vmatpush1.bf16.msra.mxu0 0
    %1900 = vmatprep.subr.bf16.mxu0 0
    %1901 = vmatpush1.bf16.msra.mxu0 0
    %1902 = vmatprep.subr.bf16.mxu0 0
    %1903 = vmatpush1.bf16.msra.mxu0 0
    %1904 = vmatprep.subr.bf16.mxu0 0
    %1905 = vmatpush1.bf16.msra.mxu0 0
    %1906 = vmatprep.subr.bf16.mxu0 0
    %1907 = vmatpush1.bf16.msra.mxu0 0
    %1908 = vmatprep.subr.bf16.mxu0 0
    %1909 = vmatpush1.bf16.msra.mxu0 0
    %1910 = vmatprep.subr.bf16.mxu0 0
    %1911 = vmatpush1.bf16.msra.mxu0 0
    %1912 = vmatprep.subr.bf16.mxu0 0
    %1913 = vmatpush1.bf16.msra.mxu0 0
    %1914 = vmatprep.mubr.bf16.mxu0 0
    %1915 = vmatmul.mubr.bf16.gmra.mrb[0].mxu0 %v1750
    %v1916 = vpop.f32.mrb[0].mxu0
    %v1917 = vadd.f32 0.0, %v1916
    %v1918 = vpop.f32.mrb[0].mxu0
    %v1919 = vadd.f32 0.0, %v1918
    %v1920 = vpop.f32.mrb[0].mxu0
    %v1921 = vpop.f32.mrb[0].mxu0
    %1922 = vdwg.mxu0
    %v1931 = vrot.slane %v1794, 4
    %v1932 = vrot.slane %v1796, 4
    %v1933 = vrot.slane %v1835, 4
    %v1934 = vrot.slane %v1837, 4
    %v1935 = vrot.slane %v1876, 4
    %v1936 = vrot.slane %v1878, 4
    %v1937 = vrot.slane %v1917, 4
    %v1938 = vrot.slane %v1919, 4
    %v1947 = vadd.f32 %v1751, %v1931
    %v1948 = vadd.f32 %v1752, %v1932
    %v1949 = vadd.f32 %v1753, %v1933
    %v1950 = vadd.f32 %v1754, %v1934
    %v1951 = vadd.f32 %v1755, %v1935
    %v1952 = vadd.f32 %v1756, %v1936
    %v1953 = vadd.f32 %v1757, %v1937
    %v1954 = vadd.f32 %v1758, %v1938
    %v1959 = vrot.slane %v1947, 4
    %v1960 = vrot.slane %v1948, 4
    %v1961 = vrot.slane %v1949, 4
    %v1962 = vrot.slane %v1950, 4
    %v1971 = vrot.slane %v1951, 4
    %v1972 = vrot.slane %v1952, 4
    %v1973 = vrot.slane %v1953, 4
    %v1974 = vrot.slane %v1954, 4
    %v1979 = vsel %vm412, %v1959, %v1971
    %v1980 = vsel %vm412, %v1960, %v1972
    %v1981 = vsel %vm412, %v1961, %v1973
    %v1982 = vsel %vm412, %v1962, %v1974
    %v1983 = vmul.f32 %v1979, 0.5
    %v1984 = vtanh.pop %v1983
    %v1985 = vadd.f32 %v1984, 1.0
    %v1986 = vmul.f32 %v1985, 0.5
    %v1987 = vmul.f32 %v1980, 0.5
    %v1988 = vtanh.pop %v1987
    %v1989 = vadd.f32 %v1988, 1.0
    %v1990 = vmul.f32 %v1989, 0.5
    %v1991 = vtanh.pop %v1981
    %v1992 = vmul.f32 %v1982, 0.5
    %v1993 = vtanh.pop %v1992
    %v1994 = vadd.f32 %v1993, 1.0
    %v1995 = vmul.f32 %v1994, 0.5
    %v1996 = vmul.f32 %v1990, %v1744
    %v1997 = vmul.f32 %v1986, %v1991
    %v1998 = vadd.f32 %v1996, %v1997
    %v1999 = vtanh.pop %v1998
    %v2000 = vmul.f32 %v1995, %v1999
    %v2001 = vld [vmem:[%s4 + $0x14] sm:$0xf]
    %v2002 = vmul.f32 %v2000, %v2001
    %v2003 = vadd.f32 %v1749, %v2002
    %v2004 = vpack.c.bf16 %v2000, %v2000
    %v2005 = vld [vmem:[#allocation2 + $0xc0] sm:$0xf]
    %v2006 = vld [vmem:[#allocation2 + $0xc8] sm:$0xf]
    %v2007 = vld [vmem:[#allocation2 + $0xd0] sm:$0xf]
    %v2008 = vld [vmem:[#allocation2 + $0xd8] sm:$0xf]
    %v2009 = vld [vmem:[#allocation2 + $0xe0] sm:$0xf]
    %v2010 = vld [vmem:[#allocation2 + $0xe8] sm:$0xf]
    %v2011 = vld [vmem:[#allocation2 + $0xf0] sm:$0xf]
    %v2012 = vld [vmem:[#allocation2 + $0xf8] sm:$0xf]
    %2013 = vmatprep.subr.bf16.mxu0 %v712
    %2014 = vmatpush1.bf16.msra.mxu0 %v711
    %2015 = vmatprep.subr.bf16.mxu0 %v720
    %2016 = vmatpush1.bf16.msra.mxu0 %v719
    %2017 = vmatprep.subr.bf16.mxu0 %v728
    %2018 = vmatpush1.bf16.msra.mxu0 %v727
    %2019 = vmatprep.subr.bf16.mxu0 %v736
    %2020 = vmatpush1.bf16.msra.mxu0 %v735
    %2021 = vmatprep.subr.bf16.mxu0 %v744
    %2022 = vmatpush1.bf16.msra.mxu0 %v743
    %2023 = vmatprep.subr.bf16.mxu0 %v752
    %2024 = vmatpush1.bf16.msra.mxu0 %v751
    %2025 = vmatprep.subr.bf16.mxu0 %v760
    %2026 = vmatpush1.bf16.msra.mxu0 %v759
    %2027 = vmatprep.subr.bf16.mxu0 %v768
    %2028 = vmatpush1.bf16.msra.mxu0 %v767
    %2029 = vmatprep.subr.bf16.mxu0 0
    %2030 = vmatpush1.bf16.msra.mxu0 0
    %2031 = vmatprep.subr.bf16.mxu0 0
    %2032 = vmatpush1.bf16.msra.mxu0 0
    %2033 = vmatprep.subr.bf16.mxu0 0
    %2034 = vmatpush1.bf16.msra.mxu0 0
    %2035 = vmatprep.subr.bf16.mxu0 0
    %2036 = vmatpush1.bf16.msra.mxu0 0
    %2037 = vmatprep.subr.bf16.mxu0 0
    %2038 = vmatpush1.bf16.msra.mxu0 0
    %2039 = vmatprep.subr.bf16.mxu0 0
    %2040 = vmatpush1.bf16.msra.mxu0 0
    %2041 = vmatprep.subr.bf16.mxu0 0
    %2042 = vmatpush1.bf16.msra.mxu0 0
    %2043 = vmatprep.subr.bf16.mxu0 0
    %2044 = vmatpush1.bf16.msra.mxu0 0
    %2045 = vmatprep.mubr.bf16.mxu0 0
    %2046 = vmatmul.mubr.bf16.gmra.mrb[0].mxu0 %v2004
    %v2047 = vpop.f32.mrb[0].mxu0
    %v2048 = vadd.f32 0.0, %v2047
    %v2049 = vpop.f32.mrb[0].mxu0
    %v2050 = vadd.f32 0.0, %v2049
    %v2051 = vpop.f32.mrb[0].mxu0
    %v2052 = vpop.f32.mrb[0].mxu0
    %2053 = vdwg.mxu0
    %2054 = vmatprep.subr.bf16.mxu0 %v714
    %2055 = vmatpush1.bf16.msra.mxu0 %v713
    %2056 = vmatprep.subr.bf16.mxu0 %v722
    %2057 = vmatpush1.bf16.msra.mxu0 %v721
    %2058 = vmatprep.subr.bf16.mxu0 %v730
    %2059 = vmatpush1.bf16.msra.mxu0 %v729
    %2060 = vmatprep.subr.bf16.mxu0 %v738
    %2061 = vmatpush1.bf16.msra.mxu0 %v737
    %2062 = vmatprep.subr.bf16.mxu0 %v746
    %2063 = vmatpush1.bf16.msra.mxu0 %v745
    %2064 = vmatprep.subr.bf16.mxu0 %v754
    %2065 = vmatpush1.bf16.msra.mxu0 %v753
    %2066 = vmatprep.subr.bf16.mxu0 %v762
    %2067 = vmatpush1.bf16.msra.mxu0 %v761
    %2068 = vmatprep.subr.bf16.mxu0 %v770
    %2069 = vmatpush1.bf16.msra.mxu0 %v769
    %2070 = vmatprep.subr.bf16.mxu0 0
    %2071 = vmatpush1.bf16.msra.mxu0 0
    %2072 = vmatprep.subr.bf16.mxu0 0
    %2073 = vmatpush1.bf16.msra.mxu0 0
    %2074 = vmatprep.subr.bf16.mxu0 0
    %2075 = vmatpush1.bf16.msra.mxu0 0
    %2076 = vmatprep.subr.bf16.mxu0 0
    %2077 = vmatpush1.bf16.msra.mxu0 0
    %2078 = vmatprep.subr.bf16.mxu0 0
    %2079 = vmatpush1.bf16.msra.mxu0 0
    %2080 = vmatprep.subr.bf16.mxu0 0
    %2081 = vmatpush1.bf16.msra.mxu0 0
    %2082 = vmatprep.subr.bf16.mxu0 0
    %2083 = vmatpush1.bf16.msra.mxu0 0
    %2084 = vmatprep.subr.bf16.mxu0 0
    %2085 = vmatpush1.bf16.msra.mxu0 0
    %2086 = vmatprep.mubr.bf16.mxu0 0
    %2087 = vmatmul.mubr.bf16.gmra.mrb[0].mxu0 %v2004
    %v2088 = vpop.f32.mrb[0].mxu0
    %v2089 = vadd.f32 0.0, %v2088
    %v2090 = vpop.f32.mrb[0].mxu0
    %v2091 = vadd.f32 0.0, %v2090
    %v2092 = vpop.f32.mrb[0].mxu0
    %v2093 = vpop.f32.mrb[0].mxu0
    %2094 = vdwg.mxu0
    %2095 = vmatprep.subr.bf16.mxu0 %v716
    %2096 = vmatpush1.bf16.msra.mxu0 %v715
    %2097 = vmatprep.subr.bf16.mxu0 %v724
    %2098 = vmatpush1.bf16.msra.mxu0 %v723
    %2099 = vmatprep.subr.bf16.mxu0 %v732
    %2100 = vmatpush1.bf16.msra.mxu0 %v731
    %2101 = vmatprep.subr.bf16.mxu0 %v740
    %2102 = vmatpush1.bf16.msra.mxu0 %v739
    %2103 = vmatprep.subr.bf16.mxu0 %v748
    %2104 = vmatpush1.bf16.msra.mxu0 %v747
    %2105 = vmatprep.subr.bf16.mxu0 %v756
    %2106 = vmatpush1.bf16.msra.mxu0 %v755
    %2107 = vmatprep.subr.bf16.mxu0 %v764
    %2108 = vmatpush1.bf16.msra.mxu0 %v763
    %2109 = vmatprep.subr.bf16.mxu0 %v772
    %2110 = vmatpush1.bf16.msra.mxu0 %v771
    %2111 = vmatprep.subr.bf16.mxu0 0
    %2112 = vmatpush1.bf16.msra.mxu0 0
    %2113 = vmatprep.subr.bf16.mxu0 0
    %2114 = vmatpush1.bf16.msra.mxu0 0
    %2115 = vmatprep.subr.bf16.mxu0 0
    %2116 = vmatpush1.bf16.msra.mxu0 0
    %2117 = vmatprep.subr.bf16.mxu0 0
    %2118 = vmatpush1.bf16.msra.mxu0 0
    %2119 = vmatprep.subr.bf16.mxu0 0
    %2120 = vmatpush1.bf16.msra.mxu0 0
    %2121 = vmatprep.subr.bf16.mxu0 0
    %2122 = vmatpush1.bf16.msra.mxu0 0
    %2123 = vmatprep.subr.bf16.mxu0 0
    %2124 = vmatpush1.bf16.msra.mxu0 0
    %2125 = vmatprep.subr.bf16.mxu0 0
    %2126 = vmatpush1.bf16.msra.mxu0 0
    %2127 = vmatprep.mubr.bf16.mxu0 0
    %2128 = vmatmul.mubr.bf16.gmra.mrb[0].mxu0 %v2004
    %v2129 = vpop.f32.mrb[0].mxu0
    %v2130 = vadd.f32 0.0, %v2129
    %v2131 = vpop.f32.mrb[0].mxu0
    %v2132 = vadd.f32 0.0, %v2131
    %v2133 = vpop.f32.mrb[0].mxu0
    %v2134 = vpop.f32.mrb[0].mxu0
    %2135 = vdwg.mxu0
    %2136 = vmatprep.subr.bf16.mxu0 %v718
    %2137 = vmatpush1.bf16.msra.mxu0 %v717
    %2138 = vmatprep.subr.bf16.mxu0 %v726
    %2139 = vmatpush1.bf16.msra.mxu0 %v725
    %2140 = vmatprep.subr.bf16.mxu0 %v734
    %2141 = vmatpush1.bf16.msra.mxu0 %v733
    %2142 = vmatprep.subr.bf16.mxu0 %v742
    %2143 = vmatpush1.bf16.msra.mxu0 %v741
    %2144 = vmatprep.subr.bf16.mxu0 %v750
    %2145 = vmatpush1.bf16.msra.mxu0 %v749
    %2146 = vmatprep.subr.bf16.mxu0 %v758
    %2147 = vmatpush1.bf16.msra.mxu0 %v757
    %2148 = vmatprep.subr.bf16.mxu0 %v766
    %2149 = vmatpush1.bf16.msra.mxu0 %v765
    %2150 = vmatprep.subr.bf16.mxu0 %v774
    %2151 = vmatpush1.bf16.msra.mxu0 %v773
    %2152 = vmatprep.subr.bf16.mxu0 0
    %2153 = vmatpush1.bf16.msra.mxu0 0
    %2154 = vmatprep.subr.bf16.mxu0 0
    %2155 = vmatpush1.bf16.msra.mxu0 0
    %2156 = vmatprep.subr.bf16.mxu0 0
    %2157 = vmatpush1.bf16.msra.mxu0 0
    %2158 = vmatprep.subr.bf16.mxu0 0
    %2159 = vmatpush1.bf16.msra.mxu0 0
    %2160 = vmatprep.subr.bf16.mxu0 0
    %2161 = vmatpush1.bf16.msra.mxu0 0
    %2162 = vmatprep.subr.bf16.mxu0 0
    %2163 = vmatpush1.bf16.msra.mxu0 0
    %2164 = vmatprep.subr.bf16.mxu0 0
    %2165 = vmatpush1.bf16.msra.mxu0 0
    %2166 = vmatprep.subr.bf16.mxu0 0
    %2167 = vmatpush1.bf16.msra.mxu0 0
    %2168 = vmatprep.mubr.bf16.mxu0 0
    %2169 = vmatmul.mubr.bf16.gmra.mrb[0].mxu0 %v2004
    %v2170 = vpop.f32.mrb[0].mxu0
    %v2171 = vadd.f32 0.0, %v2170
    %v2172 = vpop.f32.mrb[0].mxu0
    %v2173 = vadd.f32 0.0, %v2172
    %v2174 = vpop.f32.mrb[0].mxu0
    %v2175 = vpop.f32.mrb[0].mxu0
    %2176 = vdwg.mxu0
    %v2177 = vadd.f32 %v2005, %v2048
    %v2178 = vadd.f32 %v2006, %v2050
    %v2179 = vadd.f32 %v2007, %v2089
    %v2180 = vadd.f32 %v2008, %v2091
    %v2181 = vadd.f32 %v2009, %v2130
    %v2182 = vadd.f32 %v2010, %v2132
    %v2183 = vadd.f32 %v2011, %v2171
    %v2184 = vadd.f32 %v2012, %v2173
    %v2185 = vsel %vm412, %v2177, %v2181
    %v2186 = vsel %vm412, %v2178, %v2182
    %v2187 = vsel %vm412, %v2179, %v2183
    %v2188 = vsel %vm412, %v2180, %v2184
    %v2189 = vmul.f32 %v2185, 0.5
    %v2190 = vtanh.pop %v2189
    %v2191 = vadd.f32 %v2190, 1.0
    %v2192 = vmul.f32 %v2191, 0.5
    %v2193 = vmul.f32 %v2186, 0.5
    %v2194 = vtanh.pop %v2193
    %v2195 = vadd.f32 %v2194, 1.0
    %v2196 = vmul.f32 %v2195, 0.5
    %v2197 = vtanh.pop %v2187
    %v2198 = vmul.f32 %v2188, 0.5
    %v2199 = vtanh.pop %v2198
    %v2200 = vadd.f32 %v2199, 1.0
    %v2201 = vmul.f32 %v2200, 0.5
    %v2202 = vmul.f32 %v2196, %v1998
    %v2203 = vmul.f32 %v2192, %v2197
    %v2204 = vadd.f32 %v2202, %v2203
    %v2205 = vtanh.pop %v2204
    %v2206 = vmul.f32 %v2201, %v2205
    %v2207 = vld [vmem:[%s4 + $0x18] sm:$0xf]
    %v2208 = vmul.f32 %v2206, %v2207
    %v2209 = vadd.f32 %v2003, %v2208
    %v2210 = vpack.c.bf16 %v2206, %v2206
    %v2211 = vld [vmem:[#allocation2 + $0xc0] sm:$0xf0]
    %v2212 = vld [vmem:[#allocation2 + $0xc8] sm:$0xf0]
    %v2213 = vld [vmem:[#allocation2 + $0xd0] sm:$0xf0]
    %v2214 = vld [vmem:[#allocation2 + $0xd8] sm:$0xf0]
    %v2215 = vld [vmem:[#allocation2 + $0xe0] sm:$0xf0]
    %v2216 = vld [vmem:[#allocation2 + $0xe8] sm:$0xf0]
    %v2217 = vld [vmem:[#allocation2 + $0xf0] sm:$0xf0]
    %v2218 = vld [vmem:[#allocation2 + $0xf8] sm:$0xf0]
    %2219 = vmatprep.subr.bf16.mxu0 %v712
    %2220 = vmatpush1.bf16.msra.mxu0 %v711
    %2221 = vmatprep.subr.bf16.mxu0 %v720
    %2222 = vmatpush1.bf16.msra.mxu0 %v719
    %2223 = vmatprep.subr.bf16.mxu0 %v728
    %2224 = vmatpush1.bf16.msra.mxu0 %v727
    %2225 = vmatprep.subr.bf16.mxu0 %v736
    %2226 = vmatpush1.bf16.msra.mxu0 %v735
    %2227 = vmatprep.subr.bf16.mxu0 %v744
    %2228 = vmatpush1.bf16.msra.mxu0 %v743
    %2229 = vmatprep.subr.bf16.mxu0 %v752
    %2230 = vmatpush1.bf16.msra.mxu0 %v751
    %2231 = vmatprep.subr.bf16.mxu0 %v760
    %2232 = vmatpush1.bf16.msra.mxu0 %v759
    %2233 = vmatprep.subr.bf16.mxu0 %v768
    %2234 = vmatpush1.bf16.msra.mxu0 %v767
    %2235 = vmatprep.subr.bf16.mxu0 0
    %2236 = vmatpush1.bf16.msra.mxu0 0
    %2237 = vmatprep.subr.bf16.mxu0 0
    %2238 = vmatpush1.bf16.msra.mxu0 0
    %2239 = vmatprep.subr.bf16.mxu0 0
    %2240 = vmatpush1.bf16.msra.mxu0 0
    %2241 = vmatprep.subr.bf16.mxu0 0
    %2242 = vmatpush1.bf16.msra.mxu0 0
    %2243 = vmatprep.subr.bf16.mxu0 0
    %2244 = vmatpush1.bf16.msra.mxu0 0
    %2245 = vmatprep.subr.bf16.mxu0 0
    %2246 = vmatpush1.bf16.msra.mxu0 0
    %2247 = vmatprep.subr.bf16.mxu0 0
    %2248 = vmatpush1.bf16.msra.mxu0 0
    %2249 = vmatprep.subr.bf16.mxu0 0
    %2250 = vmatpush1.bf16.msra.mxu0 0
    %2251 = vmatprep.mubr.bf16.mxu0 0
    %2252 = vmatmul.mubr.bf16.gmra.mrb[0].mxu0 %v2210
    %v2253 = vpop.f32.mrb[0].mxu0
    %v2254 = vadd.f32 0.0, %v2253
    %v2255 = vpop.f32.mrb[0].mxu0
    %v2256 = vadd.f32 0.0, %v2255
    %v2257 = vpop.f32.mrb[0].mxu0
    %v2258 = vpop.f32.mrb[0].mxu0
    %2259 = vdwg.mxu0
    %2260 = vmatprep.subr.bf16.mxu0 %v714
    %2261 = vmatpush1.bf16.msra.mxu0 %v713
    %2262 = vmatprep.subr.bf16.mxu0 %v722
    %2263 = vmatpush1.bf16.msra.mxu0 %v721
    %2264 = vmatprep.subr.bf16.mxu0 %v730
    %2265 = vmatpush1.bf16.msra.mxu0 %v729
    %2266 = vmatprep.subr.bf16.mxu0 %v738
    %2267 = vmatpush1.bf16.msra.mxu0 %v737
    %2268 = vmatprep.subr.bf16.mxu0 %v746
    %2269 = vmatpush1.bf16.msra.mxu0 %v745
    %2270 = vmatprep.subr.bf16.mxu0 %v754
    %2271 = vmatpush1.bf16.msra.mxu0 %v753
    %2272 = vmatprep.subr.bf16.mxu0 %v762
    %2273 = vmatpush1.bf16.msra.mxu0 %v761
    %2274 = vmatprep.subr.bf16.mxu0 %v770
    %2275 = vmatpush1.bf16.msra.mxu0 %v769
    %2276 = vmatprep.subr.bf16.mxu0 0
    %2277 = vmatpush1.bf16.msra.mxu0 0
    %2278 = vmatprep.subr.bf16.mxu0 0
    %2279 = vmatpush1.bf16.msra.mxu0 0
    %2280 = vmatprep.subr.bf16.mxu0 0
    %2281 = vmatpush1.bf16.msra.mxu0 0
    %2282 = vmatprep.subr.bf16.mxu0 0
    %2283 = vmatpush1.bf16.msra.mxu0 0
    %2284 = vmatprep.subr.bf16.mxu0 0
    %2285 = vmatpush1.bf16.msra.mxu0 0
    %2286 = vmatprep.subr.bf16.mxu0 0
    %2287 = vmatpush1.bf16.msra.mxu0 0
    %2288 = vmatprep.subr.bf16.mxu0 0
    %2289 = vmatpush1.bf16.msra.mxu0 0
    %2290 = vmatprep.subr.bf16.mxu0 0
    %2291 = vmatpush1.bf16.msra.mxu0 0
    %2292 = vmatprep.mubr.bf16.mxu0 0
    %2293 = vmatmul.mubr.bf16.gmra.mrb[0].mxu0 %v2210
    %v2294 = vpop.f32.mrb[0].mxu0
    %v2295 = vadd.f32 0.0, %v2294
    %v2296 = vpop.f32.mrb[0].mxu0
    %v2297 = vadd.f32 0.0, %v2296
    %v2298 = vpop.f32.mrb[0].mxu0
    %v2299 = vpop.f32.mrb[0].mxu0
    %2300 = vdwg.mxu0
    %2301 = vmatprep.subr.bf16.mxu0 %v716
    %2302 = vmatpush1.bf16.msra.mxu0 %v715
    %2303 = vmatprep.subr.bf16.mxu0 %v724
    %2304 = vmatpush1.bf16.msra.mxu0 %v723
    %2305 = vmatprep.subr.bf16.mxu0 %v732
    %2306 = vmatpush1.bf16.msra.mxu0 %v731
    %2307 = vmatprep.subr.bf16.mxu0 %v740
    %2308 = vmatpush1.bf16.msra.mxu0 %v739
    %2309 = vmatprep.subr.bf16.mxu0 %v748
    %2310 = vmatpush1.bf16.msra.mxu0 %v747
    %2311 = vmatprep.subr.bf16.mxu0 %v756
    %2312 = vmatpush1.bf16.msra.mxu0 %v755
    %2313 = vmatprep.subr.bf16.mxu0 %v764
    %2314 = vmatpush1.bf16.msra.mxu0 %v763
    %2315 = vmatprep.subr.bf16.mxu0 %v772
    %2316 = vmatpush1.bf16.msra.mxu0 %v771
    %2317 = vmatprep.subr.bf16.mxu0 0
    %2318 = vmatpush1.bf16.msra.mxu0 0
    %2319 = vmatprep.subr.bf16.mxu0 0
    %2320 = vmatpush1.bf16.msra.mxu0 0
    %2321 = vmatprep.subr.bf16.mxu0 0
    %2322 = vmatpush1.bf16.msra.mxu0 0
    %2323 = vmatprep.subr.bf16.mxu0 0
    %2324 = vmatpush1.bf16.msra.mxu0 0
    %2325 = vmatprep.subr.bf16.mxu0 0
    %2326 = vmatpush1.bf16.msra.mxu0 0
    %2327 = vmatprep.subr.bf16.mxu0 0
    %2328 = vmatpush1.bf16.msra.mxu0 0
    %2329 = vmatprep.subr.bf16.mxu0 0
    %2330 = vmatpush1.bf16.msra.mxu0 0
    %2331 = vmatprep.subr.bf16.mxu0 0
    %2332 = vmatpush1.bf16.msra.mxu0 0
    %2333 = vmatprep.mubr.bf16.mxu0 0
    %2334 = vmatmul.mubr.bf16.gmra.mrb[0].mxu0 %v2210
    %v2335 = vpop.f32.mrb[0].mxu0
    %v2336 = vadd.f32 0.0, %v2335
    %v2337 = vpop.f32.mrb[0].mxu0
    %v2338 = vadd.f32 0.0, %v2337
    %v2339 = vpop.f32.mrb[0].mxu0
    %v2340 = vpop.f32.mrb[0].mxu0
    %2341 = vdwg.mxu0
    %2342 = vmatprep.subr.bf16.mxu0 %v718
    %2343 = vmatpush1.bf16.msra.mxu0 %v717
    %2344 = vmatprep.subr.bf16.mxu0 %v726
    %2345 = vmatpush1.bf16.msra.mxu0 %v725
    %2346 = vmatprep.subr.bf16.mxu0 %v734
    %2347 = vmatpush1.bf16.msra.mxu0 %v733
    %2348 = vmatprep.subr.bf16.mxu0 %v742
    %2349 = vmatpush1.bf16.msra.mxu0 %v741
    %2350 = vmatprep.subr.bf16.mxu0 %v750
    %2351 = vmatpush1.bf16.msra.mxu0 %v749
    %2352 = vmatprep.subr.bf16.mxu0 %v758
    %2353 = vmatpush1.bf16.msra.mxu0 %v757
    %2354 = vmatprep.subr.bf16.mxu0 %v766
    %2355 = vmatpush1.bf16.msra.mxu0 %v765
    %2356 = vmatprep.subr.bf16.mxu0 %v774
    %2357 = vmatpush1.bf16.msra.mxu0 %v773
    %2358 = vmatprep.subr.bf16.mxu0 0
    %2359 = vmatpush1.bf16.msra.mxu0 0
    %2360 = vmatprep.subr.bf16.mxu0 0
    %2361 = vmatpush1.bf16.msra.mxu0 0
    %2362 = vmatprep.subr.bf16.mxu0 0
    %2363 = vmatpush1.bf16.msra.mxu0 0
    %2364 = vmatprep.subr.bf16.mxu0 0
    %2365 = vmatpush1.bf16.msra.mxu0 0
    %2366 = vmatprep.subr.bf16.mxu0 0
    %2367 = vmatpush1.bf16.msra.mxu0 0
    %2368 = vmatprep.subr.bf16.mxu0 0
    %2369 = vmatpush1.bf16.msra.mxu0 0
    %2370 = vmatprep.subr.bf16.mxu0 0
    %2371 = vmatpush1.bf16.msra.mxu0 0
    %2372 = vmatprep.subr.bf16.mxu0 0
    %2373 = vmatpush1.bf16.msra.mxu0 0
    %2374 = vmatprep.mubr.bf16.mxu0 0
    %2375 = vmatmul.mubr.bf16.gmra.mrb[0].mxu0 %v2210
    %v2376 = vpop.f32.mrb[0].mxu0
    %v2377 = vadd.f32 0.0, %v2376
    %v2378 = vpop.f32.mrb[0].mxu0
    %v2379 = vadd.f32 0.0, %v2378
    %v2380 = vpop.f32.mrb[0].mxu0
    %v2381 = vpop.f32.mrb[0].mxu0
    %2382 = vdwg.mxu0
    %v2391 = vrot.slane %v2254, 4
    %v2392 = vrot.slane %v2256, 4
    %v2393 = vrot.slane %v2295, 4
    %v2394 = vrot.slane %v2297, 4
    %v2395 = vrot.slane %v2336, 4
    %v2396 = vrot.slane %v2338, 4
    %v2397 = vrot.slane %v2377, 4
    %v2398 = vrot.slane %v2379, 4
    %v2407 = vadd.f32 %v2211, %v2391
    %v2408 = vadd.f32 %v2212, %v2392
    %v2409 = vadd.f32 %v2213, %v2393
    %v2410 = vadd.f32 %v2214, %v2394
    %v2411 = vadd.f32 %v2215, %v2395
    %v2412 = vadd.f32 %v2216, %v2396
    %v2413 = vadd.f32 %v2217, %v2397
    %v2414 = vadd.f32 %v2218, %v2398
    %v2419 = vrot.slane %v2407, 4
    %v2420 = vrot.slane %v2408, 4
    %v2421 = vrot.slane %v2409, 4
    %v2422 = vrot.slane %v2410, 4
    %v2431 = vrot.slane %v2411, 4
    %v2432 = vrot.slane %v2412, 4
    %v2433 = vrot.slane %v2413, 4
    %v2434 = vrot.slane %v2414, 4
    %v2439 = vsel %vm412, %v2419, %v2431
    %v2440 = vsel %vm412, %v2420, %v2432
    %v2441 = vsel %vm412, %v2421, %v2433
    %v2442 = vsel %vm412, %v2422, %v2434
    %v2443 = vmul.f32 %v2439, 0.5
    %v2444 = vtanh.pop %v2443
    %v2445 = vadd.f32 %v2444, 1.0
    %v2446 = vmul.f32 %v2445, 0.5
    %v2447 = vmul.f32 %v2440, 0.5
    %v2448 = vtanh.pop %v2447
    %v2449 = vadd.f32 %v2448, 1.0
    %v2450 = vmul.f32 %v2449, 0.5
    %v2451 = vtanh.pop %v2441
    %v2452 = vmul.f32 %v2442, 0.5
    %v2453 = vtanh.pop %v2452
    %v2454 = vadd.f32 %v2453, 1.0
    %v2455 = vmul.f32 %v2454, 0.5
    %v2456 = vmul.f32 %v2450, %v2204
    %v2457 = vmul.f32 %v2446, %v2451
    %v2458 = vadd.f32 %v2456, %v2457
    %v2459 = vtanh.pop %v2458
    %v2460 = vmul.f32 %v2455, %v2459
    %v2461 = vld [vmem:[%s4 + $0x1c] sm:$0xf]
    %v2462 = vmul.f32 %v2460, %v2461
    %v2463 = vadd.f32 %v2209, %v2462
    %vm2464 = vcmask 1043456
    %v2465 = vsel %vm2464, %v2463, 0.0
    %v2466 = vrot.slane %v2465, 4
    %v2467 = vadd.f32 %v2465, %v2466
    %v2468 = vrot.slane %v2467, 2
    %v2469 = vadd.f32 %v2467, %v2468
    %v2470 = vrot.slane %v2469, 1
    %v2471 = vadd.f32 %v2469, %v2470
    %2472 = vadd.xlane.f32.xlu0 %v2471
    %v2473 = vpop.xlane.xlu0 %2472
    %v2474 = vld [vmem:[#allocation3] sm:$0x1]
    %v2475 = vadd.f32 %v2473, %v2474
    %v2476 = vmul.f32 %v2475, 0.5
    %v2477 = vtanh.pop %v2476
    %v2478 = vadd.f32 %v2477, 1.0
    %v2479 = vmul.f32 %v2478, 0.5
    %vm2480 = vcmask 0
    %2481 = vst.msk [vmem:[#allocation9] sm:$0x1] %vm2480, %v2479
    // Predicated region
    $region34: #{tpu_custom_call.1} parent=1 // pred_check
      _
    $region35: #{tpu_custom_call.1} parent=1 // pred_check_branch
      %2483 = sbr.rel (0) target = $region37
    $region36: #{tpu_custom_call.1} parent=1 // pred_region
      %s2485 = ssub.s32 16, 16
      %2486 = vsyncadd [#allocation6], %s2485
      %s2488 = sshll.u32 [#allocation9], 4
      %s2489 = int_to_ptr.vmem [resolvable:$true] %s2488
      %2491 = dma.vmem_to_hbm [thread:$0]  %s2489, 16, %s6, [#allocation6]
    $region37: #{tpu_custom_call.1} parent=1 // pred_fallthru
      _
    // Predicated region
    $region38: #{tpu_custom_call.1} parent=1 // pred_check
      _
    $region39: #{tpu_custom_call.1} parent=1 // pred_check_branch
      %2493 = sbr.rel (0) target = $region41
    $region40: #{tpu_custom_call.1} parent=1 // pred_region
      %2494 = dma.done [#allocation6], 16
    $region41: #{tpu_custom_call.1} parent=1 // pred_fallthru
      _
    %2495 = vsyncpa [#allocation5], 1
    %2496 = vsyncpa [#allocation8], 1
    %2497 = vsyncpa [#allocation6], 1

</llo_original>
